<compile_context>
chip_gen: v7x
topology: tpu7x:2x2x1
jax: 0.10.0
libtpu: 0.0.40
codegen_flags: <defaults>
</compile_context>

<pallas_src>
import functools

import jax
import jax.numpy as jnp
from jax.experimental import pallas as pl
from jax.experimental.pallas import tpu as pltpu

K = 7            # kernel_size (must be odd, matches module default)
PAD = K // 2
LANE = 128
SUBLANE = 8


def _round_up(x, m):
    return (x + m - 1) // m * m


# ----------------------------- Pallas kernel --------------------------------
def _r1d_kernel(x_hbm, w1_ref, w2_ref, wd_ref, sb1_ref, sb2_ref, sbd_ref,
                o_ref, xbuf, sem, *, stride, tl, l_out, in_rows, off):
    """One (batch, L-tile) grid step.

    x_hbm  : (N, L_xp, C_in_p)   bf16, resident in HBM (pl.ANY); DMA'd per tile
    w1_ref : (K*C_in_p,  C_out_p) bf16  conv1 taps stacked k-major (im2col weights)
    w2_ref : (K*C_out_p, C_out_p) bf16  conv2 taps stacked k-major
    wd_ref : (C_in_p, C_out_p)    bf16  1x1 downsample weights
    sb*_ref: (2, C_out_p)         f32   folded BN [scale; shift]
    o_ref  : (1, tl, C_out_p)     f32
    xbuf   : VMEM (in_rows, C_in_p) bf16 scratch -- the halo input window
    """
    b = pl.program_id(0)
    t = pl.program_id(1)
    c_in_p = xbuf.shape[1]
    tle = tl + 2 * PAD                      # h1 rows needed (output tile + halo)

    # ---- DMA this tile's overlapping (halo) input window from HBM ----------
    base = pl.multiple_of(t * (tl * stride), SUBLANE)
    cp = pltpu.make_async_copy(x_hbm.at[b, pl.ds(base, in_rows)], xbuf, sem.at[0])
    cp.start()
    cp.wait()

    xw = xbuf[...]                          # (in_rows, C_in_p) bf16

    def rows(start, n, s):
        # n rows: start, start+s, ..., start+(n-1)*s  (no strided sublane slices)
        if s == 1:
            return xw[start:start + n, :]
        chunk = xw[start:start + n * s, :]
        return chunk.reshape(n, s, c_in_p)[:, 0, :]

    # ---- conv1 (k=K, stride) + BN1 + ReLU, as one im2col matmul ------------
    im1 = jnp.concatenate([rows(k, tle, stride) for k in range(K)], axis=-1)
    h1 = jnp.dot(im1, w1_ref[...], preferred_element_type=jnp.float32)
    h1 = jnp.maximum(h1 * sb1_ref[0:1, :] + sb1_ref[1:2, :], 0.0)

    # rows falling into conv2's zero-padding (outside [0, l_out)) must be zero
    e = jax.lax.broadcasted_iota(jnp.int32, (tle, 1), 0)
    j = t * tl - PAD + e                    # global h1 row index
    h1 = jnp.where((j >= 0) & (j < l_out), h1, 0.0)
    h1b = h1.astype(jnp.bfloat16)

    # ---- conv2 (k=K, stride 1) + BN2: im2col built directly from h1 --------
    im2 = jnp.concatenate([h1b[k:k + tl, :] for k in range(K)], axis=-1)
    h2 = jnp.dot(im2, w2_ref[...], preferred_element_type=jnp.float32)
    h2 = h2 * sb2_ref[0:1, :] + sb2_ref[1:2, :]

    # ---- downsample branch: 1x1 conv (stride) + BN --------------------------
    if stride == 1:
        xd = xw[off:off + tl, :]
    else:
        xd = xw[off:off + tl * stride, :].reshape(tl, stride, c_in_p)[:, 0, :]
    ident = jnp.dot(xd, wd_ref[...], preferred_element_type=jnp.float32)
    ident = ident * sbd_ref[0:1, :] + sbd_ref[1:2, :]

    # ---- residual add + final ReLU ------------------------------------------
    o_ref[0] = jnp.maximum(h2 + ident, 0.0).astype(o_ref.dtype)


# ------------------------------- wrapper -------------------------------------
def r1d_block(x_ncl, params, stride=1, tile_l=None):
    w1, w2, wd, sb1, sb2, sbd = params
    n, c_in, L = x_ncl.shape
    c_out = w1.shape[2]
    l_out = (L + 2 * PAD - K) // stride + 1

    c_in_p = _round_up(c_in, LANE)
    c_out_p = _round_up(c_out, LANE)

    # L tile: largest multiple of 8 that keeps the per-tile working set within
    # a conservative VMEM budget (safe for v5e/v6e/v7x scoped limits).
    if tile_l is None:
        per_row = 2 * K * (c_in_p + c_out_p) + 2 * stride * c_in_p + 12 * c_out_p
        tile_l = max(SUBLANE,
                     min(1024, ((8 << 20) // per_row) // SUBLANE * SUBLANE))
    tile_l = _round_up(tile_l, SUBLANE)
    tl = min(tile_l, _round_up(l_out, SUBLANE))
    nt = -(-l_out // tl)                                   # cdiv

    off = PAD * (stride + 1)                               # left halo offset
    in_rows = _round_up((tl + 2 * PAD) * stride + K - 1, SUBLANE)
    l_xp = max(off + L + PAD * stride, (nt - 1) * tl * stride + in_rows)

    # layout glue: NCL -> NLC, bf16, lane-pad channels, halo-pad L.
    # (single materialization; the small halo pad rides along with the
    #  mandatory channel pad / transpose)
    x_nlc = jnp.transpose(x_ncl, (0, 2, 1)).astype(jnp.bfloat16)
    x_p = jnp.pad(x_nlc, ((0, 0), (off, l_xp - off - L), (0, c_in_p - c_in)))

    # weights: channel-pad, stack taps k-major -> (K*C, C_out_p) im2col weights
    w1_p = jnp.pad(w1.astype(jnp.bfloat16),
                   ((0, 0), (0, c_in_p - c_in), (0, c_out_p - c_out))
                   ).reshape(K * c_in_p, c_out_p)
    w2_p = jnp.pad(w2.astype(jnp.bfloat16),
                   ((0, 0), (0, c_out_p - c_out), (0, c_out_p - c_out))
                   ).reshape(K * c_out_p, c_out_p)
    wd_p = jnp.pad(wd.astype(jnp.bfloat16),
                   ((0, c_in_p - c_in), (0, c_out_p - c_out)))
    sb1_p = jnp.pad(sb1, ((0, 0), (0, c_out_p - c_out)))
    sb2_p = jnp.pad(sb2, ((0, 0), (0, c_out_p - c_out)))
    sbd_p = jnp.pad(sbd, ((0, 0), (0, c_out_p - c_out)))

    kernel = functools.partial(_r1d_kernel, stride=stride, tl=tl, l_out=l_out,
                               in_rows=in_rows, off=off)

    flops = 2 * n * nt * tl * c_out_p * (K * c_in_p + K * c_out_p + c_in_p)
    bytes_accessed = (x_p.size * 2 + w1_p.size * 2 + w2_p.size * 2
                      + wd_p.size * 2 + 3 * 2 * c_out_p * 4
                      + n * nt * tl * c_out_p * 4)

    out = pl.pallas_call(
        kernel,
        out_shape=jax.ShapeDtypeStruct((n, nt * tl, c_out_p), jnp.float32),
        grid_spec=pltpu.PrefetchScalarGridSpec(
            num_scalar_prefetch=0,
            grid=(n, nt),
            in_specs=[
                pl.BlockSpec(memory_space=pl.ANY),                 # x stays in HBM
                pl.BlockSpec((K * c_in_p, c_out_p), lambda b, t: (0, 0)),
                pl.BlockSpec((K * c_out_p, c_out_p), lambda b, t: (0, 0)),
                pl.BlockSpec((c_in_p, c_out_p), lambda b, t: (0, 0)),
                pl.BlockSpec((2, c_out_p), lambda b, t: (0, 0)),
                pl.BlockSpec((2, c_out_p), lambda b, t: (0, 0)),
                pl.BlockSpec((2, c_out_p), lambda b, t: (0, 0)),
            ],
            out_specs=pl.BlockSpec((1, tl, c_out_p), lambda b, t: (b, t, 0)),
            scratch_shapes=[
                pltpu.VMEM((in_rows, c_in_p), jnp.bfloat16),
                pltpu.SemaphoreType.DMA((1,)),
            ],
        ),
        compiler_params=pltpu.CompilerParams(
            dimension_semantics=("parallel", "parallel"),
            vmem_limit_bytes=64 * 1024 * 1024,
        ),
        cost_estimate=pl.CostEstimate(flops=flops, transcendentals=0,
                                      bytes_accessed=bytes_accessed),
    )(x_p, w1_p, w2_p, wd_p, sb1_p, sb2_p, sbd_p)

    # crop L / channel padding, back to PyTorch layout (N, C_out, L_out)
    return jnp.transpose(out[:, :l_out, :c_out], (0, 2, 1))


# ----------------------- deterministic parameter init ------------------------
def init_params(key, c_in, c_out):
    k1, k2, k3, kbn = jax.random.split(key, 4)
    w1 = 0.1 * jax.random.normal(k1, (K, c_in, c_out), jnp.float32)
    w2 = 0.1 * jax.random.normal(k2, (K, c_out, c_out), jnp.float32)
    wd = 0.1 * jax.random.normal(k3, (c_in, c_out), jnp.float32)

    def bn_fold(k):
        kg, kb, km, kv = jax.random.split(k, 4)
        gamma = 1.0 + 0.1 * jax.random.normal(kg, (c_out,), jnp.float32)
        beta = 0.1 * jax.random.normal(kb, (c_out,), jnp.float32)
        mean = 0.1 * jax.random.normal(km, (c_out,), jnp.float32)
        var = jax.random.uniform(kv, (c_out,), jnp.float32, 0.5, 1.5)
        scale = gamma / jnp.sqrt(var + 1e-5)
        shift = beta - mean * scale
        return jnp.stack([scale, shift], axis=0)   # (2, c_out)

    kb1, kb2, kbd = jax.random.split(kbn, 3)
    return w1, w2, wd, bn_fold(kb1), bn_fold(kb2), bn_fold(kbd)


# ------------------------ pure-JAX reference (for check) ---------------------
def r1d_ref(x_ncl, params, stride=1):
    # Mirrors the kernel's numerics: bf16 operands, f32 accumulation.
    w1, w2, wd, sb1, sb2, sbd = params
    x = jnp.transpose(x_ncl, (0, 2, 1)).astype(jnp.bfloat16)   # (N, L, C_in)
    w1 = w1.astype(jnp.bfloat16)
    w2 = w2.astype(jnp.bfloat16)
    wd = wd.astype(jnp.bfloat16)
    n = x.shape[0]

    def conv(xin, w, s):
        lp = xin.shape[1]
        lo = (lp + 2 * PAD - K) // s + 1
        xp = jnp.pad(xin, ((0, 0), (PAD, PAD), (0, 0)))
        y = jnp.zeros((n, lo, w.shape[2]), jnp.float32)
        for k in range(K):
            xs = xp[:, k:k + (lo - 1) * s + 1:s, :]
            y = y + jnp.einsum('nlc,cd->nld', xs, w[k],
                               preferred_element_type=jnp.float32)
        return y

    h1 = jnp.maximum(conv(x, w1, stride) * sb1[0] + sb1[1], 0.0)
    h1 = h1.astype(jnp.bfloat16)
    h2 = conv(h1, w2, 1) * sb2[0] + sb2[1]
    ident = jnp.einsum('nlc,cd->nld', x[:, ::stride, :], wd,
                       preferred_element_type=jnp.float32) * sbd[0] + sbd[1]
    out = jnp.maximum(h2 + ident, 0.0)
    return jnp.transpose(out, (0, 2, 1))


# ---------------------------------- main --------------------------------------
if __name__ == "__main__":
    key = jax.random.PRNGKey(0)
    kx, kp = jax.random.split(key)

    N, C_IN, C_OUT, L = 2, 4, 8, 16
    x = jax.random.normal(kx, (N, C_IN, L), jnp.float32)      # PyTorch NCL input
    params = init_params(kp, C_IN, C_OUT)

    def check(stride, tile_l=None):
        out = jax.block_until_ready(r1d_block(x, params, stride=stride,
                                              tile_l=tile_l))
        ref = r1d_ref(x, params, stride=stride)
        assert out.shape == ref.shape, (out.shape, ref.shape)
        max_err = float(jnp.max(jnp.abs(out - ref)))
        assert jnp.allclose(out, ref, rtol=1e-2, atol=1e-2), \
            f"mismatch (stride={stride}, tile_l={tile_l}): {max_err}"

    check(stride=1)                 # single-tile path
    check(stride=2)                 # strided conv1 / downsample path
    check(stride=1, tile_l=8)       # forced multi-tile path (halo across tiles)

    print("KERNEL_OK")
</pallas_src>

<mosaic_0001>
module attributes {stable_mosaic.version = 11 : i64} {
  func.func @_r1d_kernel(%arg0: i32, %arg1: i32, %arg2: memref<2x32x128xbf16, #tpu.memory_space<any>>, %arg3: memref<896x128xbf16, #tpu.memory_space<vmem>>, %arg4: memref<896x128xbf16, #tpu.memory_space<vmem>>, %arg5: memref<128x128xbf16, #tpu.memory_space<vmem>>, %arg6: memref<2x128xf32, #tpu.memory_space<vmem>>, %arg7: memref<2x128xf32, #tpu.memory_space<vmem>>, %arg8: memref<2x128xf32, #tpu.memory_space<vmem>>, %arg9: memref<1x16x128xf32, #tpu.memory_space<vmem>>, %arg10: memref<32x128xbf16, #tpu.memory_space<vmem>>, %arg11: memref<1x!tpu.dma_semaphore, #tpu.memory_space<semaphore_mem>>) attributes {dimension_semantics = [#tpu.dimension_semantics<parallel>, #tpu.dimension_semantics<parallel>], iteration_bounds = array<i64: 2, 1>, scalar_prefetch = 0 : i64, scratch_operands = 2 : i64, tpu.core_type = #tpu.core_type<tc>, window_params = [{}, {pipeline_mode = #tpu.pipeline_mode<synchronous>, transform_indices = @transform_1, window_bounds = array<i64: 896, 128>}, {pipeline_mode = #tpu.pipeline_mode<synchronous>, transform_indices = @transform_2, window_bounds = array<i64: 896, 128>}, {pipeline_mode = #tpu.pipeline_mode<synchronous>, transform_indices = @transform_3, window_bounds = array<i64: 128, 128>}, {pipeline_mode = #tpu.pipeline_mode<synchronous>, transform_indices = @transform_4, window_bounds = array<i64: 2, 128>}, {pipeline_mode = #tpu.pipeline_mode<synchronous>, transform_indices = @transform_5, window_bounds = array<i64: 2, 128>}, {pipeline_mode = #tpu.pipeline_mode<synchronous>, transform_indices = @transform_6, window_bounds = array<i64: 2, 128>}, {transform_indices = @transform_7, window_bounds = array<i64: 1, 16, 128>}]} {
    %c16_i32 = arith.constant 16 : i32
    %0 = arith.muli %arg1, %c16_i32 : i32
    %1 = tpu.assume_multiple %0, 8 : i32
    %c0_i32 = arith.constant 0 : i32
    %c0_i32_0 = arith.constant 0 : i32
    %2 = tpu.memref_slice %arg2[%arg0, %1, %c0_i32_0] : memref<2x32x128xbf16, #tpu.memory_space<any>> -> memref<1x32x128xbf16, #tpu.memory_space<any>>
    %3 = tpu.memref_squeeze %2 : memref<1x32x128xbf16, #tpu.memory_space<any>> -> memref<32x128xbf16, #tpu.memory_space<any>>
    %4 = tpu.memref_slice %arg11[%c0_i32] : memref<1x!tpu.dma_semaphore, #tpu.memory_space<semaphore_mem>> -> memref<1x!tpu.dma_semaphore, #tpu.memory_space<semaphore_mem>>
    %5 = tpu.memref_squeeze %4 : memref<1x!tpu.dma_semaphore, #tpu.memory_space<semaphore_mem>> -> memref<!tpu.dma_semaphore, #tpu.memory_space<semaphore_mem>>
    tpu.enqueue_dma source(%3 : memref<32x128xbf16, #tpu.memory_space<any>>) target(%arg10 : memref<32x128xbf16, #tpu.memory_space<vmem>>) target_semaphore(%5 : memref<!tpu.dma_semaphore, #tpu.memory_space<semaphore_mem>>)
    %c0_i32_1 = arith.constant 0 : i32
    %c0_i32_2 = arith.constant 0 : i32
    %6 = tpu.memref_slice %arg2[%arg0, %1, %c0_i32_2] : memref<2x32x128xbf16, #tpu.memory_space<any>> -> memref<1x32x128xbf16, #tpu.memory_space<any>>
    %7 = tpu.memref_squeeze %6 : memref<1x32x128xbf16, #tpu.memory_space<any>> -> memref<32x128xbf16, #tpu.memory_space<any>>
    %8 = tpu.memref_slice %arg11[%c0_i32_1] : memref<1x!tpu.dma_semaphore, #tpu.memory_space<semaphore_mem>> -> memref<1x!tpu.dma_semaphore, #tpu.memory_space<semaphore_mem>>
    %9 = tpu.memref_squeeze %8 : memref<1x!tpu.dma_semaphore, #tpu.memory_space<semaphore_mem>> -> memref<!tpu.dma_semaphore, #tpu.memory_space<semaphore_mem>>
    tpu.wait_dma2 semaphore(%9 : memref<!tpu.dma_semaphore, #tpu.memory_space<semaphore_mem>>) src(%7 : memref<32x128xbf16, #tpu.memory_space<any>>) dst(%arg10 : memref<32x128xbf16, #tpu.memory_space<vmem>>)
    %c0 = arith.constant 0 : index
    %c0_3 = arith.constant 0 : index
    %10 = vector.load %arg10[%c0, %c0_3] : memref<32x128xbf16, #tpu.memory_space<vmem>>, vector<32x128xbf16>
    %11 = vector.extract_strided_slice %10 {offsets = [0, 0], sizes = [22, 128], strides = [1, 1]} : vector<32x128xbf16> to vector<22x128xbf16>
    %12 = vector.extract_strided_slice %10 {offsets = [1, 0], sizes = [22, 128], strides = [1, 1]} : vector<32x128xbf16> to vector<22x128xbf16>
    %13 = vector.extract_strided_slice %10 {offsets = [2, 0], sizes = [22, 128], strides = [1, 1]} : vector<32x128xbf16> to vector<22x128xbf16>
    %14 = vector.extract_strided_slice %10 {offsets = [3, 0], sizes = [22, 128], strides = [1, 1]} : vector<32x128xbf16> to vector<22x128xbf16>
    %15 = vector.extract_strided_slice %10 {offsets = [4, 0], sizes = [22, 128], strides = [1, 1]} : vector<32x128xbf16> to vector<22x128xbf16>
    %16 = vector.extract_strided_slice %10 {offsets = [5, 0], sizes = [22, 128], strides = [1, 1]} : vector<32x128xbf16> to vector<22x128xbf16>
    %17 = vector.extract_strided_slice %10 {offsets = [6, 0], sizes = [22, 128], strides = [1, 1]} : vector<32x128xbf16> to vector<22x128xbf16>
    %18 = tpu.concatenate %11, %12, %13, %14, %15, %16, %17 in 1 : vector<22x128xbf16>, vector<22x128xbf16>, vector<22x128xbf16>, vector<22x128xbf16>, vector<22x128xbf16>, vector<22x128xbf16>, vector<22x128xbf16> -> vector<22x896xbf16>
    %c0_4 = arith.constant 0 : index
    %c0_5 = arith.constant 0 : index
    %19 = vector.load %arg3[%c0_4, %c0_5] : memref<896x128xbf16, #tpu.memory_space<vmem>>, vector<896x128xbf16>
    %cst = arith.constant dense<0.000000e+00> : vector<22x128xf32>
    %20 = tpu.matmul %18, %19, %cst {dimension_numbers = #tpu.dot_dimension_numbers<[1], [0], [0], [1], [0, 0, 1, 1], [], []>} : vector<22x896xbf16>, vector<896x128xbf16>, vector<22x128xf32> -> vector<22x128xf32>
    %c0_6 = arith.constant 0 : index
    %c0_7 = arith.constant 0 : index
    %21 = vector.load %arg6[%c0_6, %c0_7] : memref<2x128xf32, #tpu.memory_space<vmem>>, vector<1x128xf32>
    %22 = vector.broadcast %21 : vector<1x128xf32> to vector<22x128xf32>
    %23 = arith.mulf %20, %22 : vector<22x128xf32>
    %c1 = arith.constant 1 : index
    %c0_8 = arith.constant 0 : index
    %24 = vector.load %arg6[%c1, %c0_8] : memref<2x128xf32, #tpu.memory_space<vmem>>, vector<1x128xf32>
    %25 = vector.broadcast %24 : vector<1x128xf32> to vector<22x128xf32>
    %26 = arith.addf %23, %25 : vector<22x128xf32>
    %cst_9 = arith.constant 0.000000e+00 : f32
    %27 = vector.broadcast %cst_9 : f32 to vector<22x128xf32>
    %28 = arith.maximumf %26, %27 : vector<22x128xf32>
    %29 = tpu.iota {dimensions = array<i32: 0>} : vector<22x1xi32>
    %c16_i32_10 = arith.constant 16 : i32
    %30 = arith.muli %arg1, %c16_i32_10 : i32
    %c3_i32 = arith.constant 3 : i32
    %31 = arith.subi %30, %c3_i32 : i32
    %32 = vector.broadcast %31 : i32 to vector<22x1xi32>
    %33 = arith.addi %32, %29 : vector<22x1xi32>
    %c0_i32_11 = arith.constant 0 : i32
    %34 = vector.broadcast %c0_i32_11 : i32 to vector<22x1xi32>
    %35 = arith.cmpi sge, %33, %34 : vector<22x1xi32>
    %c16_i32_12 = arith.constant 16 : i32
    %36 = vector.broadcast %c16_i32_12 : i32 to vector<22x1xi32>
    %37 = arith.cmpi slt, %33, %36 : vector<22x1xi32>
    %38 = arith.andi %35, %37 : vector<22x1xi1>
    %cst_13 = arith.constant 0.000000e+00 : f32
    %39 = vector.shape_cast %38 : vector<22x1xi1> to vector<22x1xi1>
    %40 = vector.broadcast %39 : vector<22x1xi1> to vector<22x128xi1>
    %41 = vector.broadcast %cst_13 : f32 to vector<22x128xf32>
    %42 = arith.select %40, %28, %41 : vector<22x128xi1>, vector<22x128xf32>
    %43 = arith.truncf %42 : vector<22x128xf32> to vector<22x128xbf16>
    %44 = vector.extract_strided_slice %43 {offsets = [0, 0], sizes = [16, 128], strides = [1, 1]} : vector<22x128xbf16> to vector<16x128xbf16>
    %45 = vector.extract_strided_slice %43 {offsets = [1, 0], sizes = [16, 128], strides = [1, 1]} : vector<22x128xbf16> to vector<16x128xbf16>
    %46 = vector.extract_strided_slice %43 {offsets = [2, 0], sizes = [16, 128], strides = [1, 1]} : vector<22x128xbf16> to vector<16x128xbf16>
    %47 = vector.extract_strided_slice %43 {offsets = [3, 0], sizes = [16, 128], strides = [1, 1]} : vector<22x128xbf16> to vector<16x128xbf16>
    %48 = vector.extract_strided_slice %43 {offsets = [4, 0], sizes = [16, 128], strides = [1, 1]} : vector<22x128xbf16> to vector<16x128xbf16>
    %49 = vector.extract_strided_slice %43 {offsets = [5, 0], sizes = [16, 128], strides = [1, 1]} : vector<22x128xbf16> to vector<16x128xbf16>
    %50 = vector.extract_strided_slice %43 {offsets = [6, 0], sizes = [16, 128], strides = [1, 1]} : vector<22x128xbf16> to vector<16x128xbf16>
    %51 = tpu.concatenate %44, %45, %46, %47, %48, %49, %50 in 1 : vector<16x128xbf16>, vector<16x128xbf16>, vector<16x128xbf16>, vector<16x128xbf16>, vector<16x128xbf16>, vector<16x128xbf16>, vector<16x128xbf16> -> vector<16x896xbf16>
    %c0_14 = arith.constant 0 : index
    %c0_15 = arith.constant 0 : index
    %52 = vector.load %arg4[%c0_14, %c0_15] : memref<896x128xbf16, #tpu.memory_space<vmem>>, vector<896x128xbf16>
    %cst_16 = arith.constant dense<0.000000e+00> : vector<16x128xf32>
    %53 = tpu.matmul %51, %52, %cst_16 {dimension_numbers = #tpu.dot_dimension_numbers<[1], [0], [0], [1], [0, 0, 1, 1], [], []>} : vector<16x896xbf16>, vector<896x128xbf16>, vector<16x128xf32> -> vector<16x128xf32>
    %c0_17 = arith.constant 0 : index
    %c0_18 = arith.constant 0 : index
    %54 = vector.load %arg7[%c0_17, %c0_18] : memref<2x128xf32, #tpu.memory_space<vmem>>, vector<1x128xf32>
    %55 = vector.broadcast %54 : vector<1x128xf32> to vector<16x128xf32>
    %56 = arith.mulf %53, %55 : vector<16x128xf32>
    %c1_19 = arith.constant 1 : index
    %c0_20 = arith.constant 0 : index
    %57 = vector.load %arg7[%c1_19, %c0_20] : memref<2x128xf32, #tpu.memory_space<vmem>>, vector<1x128xf32>
    %58 = vector.broadcast %57 : vector<1x128xf32> to vector<16x128xf32>
    %59 = arith.addf %56, %58 : vector<16x128xf32>
    %60 = vector.extract_strided_slice %10 {offsets = [6, 0], sizes = [16, 128], strides = [1, 1]} : vector<32x128xbf16> to vector<16x128xbf16>
    %c0_21 = arith.constant 0 : index
    %c0_22 = arith.constant 0 : index
    %61 = vector.load %arg5[%c0_21, %c0_22] : memref<128x128xbf16, #tpu.memory_space<vmem>>, vector<128x128xbf16>
    %cst_23 = arith.constant dense<0.000000e+00> : vector<16x128xf32>
    %62 = tpu.matmul %60, %61, %cst_23 {dimension_numbers = #tpu.dot_dimension_numbers<[1], [0], [0], [1], [0, 0, 1, 1], [], []>} : vector<16x128xbf16>, vector<128x128xbf16>, vector<16x128xf32> -> vector<16x128xf32>
    %c0_24 = arith.constant 0 : index
    %c0_25 = arith.constant 0 : index
    %63 = vector.load %arg8[%c0_24, %c0_25] : memref<2x128xf32, #tpu.memory_space<vmem>>, vector<1x128xf32>
    %64 = vector.broadcast %63 : vector<1x128xf32> to vector<16x128xf32>
    %65 = arith.mulf %62, %64 : vector<16x128xf32>
    %c1_26 = arith.constant 1 : index
    %c0_27 = arith.constant 0 : index
    %66 = vector.load %arg8[%c1_26, %c0_27] : memref<2x128xf32, #tpu.memory_space<vmem>>, vector<1x128xf32>
    %67 = vector.broadcast %66 : vector<1x128xf32> to vector<16x128xf32>
    %68 = arith.addf %65, %67 : vector<16x128xf32>
    %69 = arith.addf %59, %68 : vector<16x128xf32>
    %cst_28 = arith.constant 0.000000e+00 : f32
    %70 = vector.broadcast %cst_28 : f32 to vector<16x128xf32>
    %71 = arith.maximumf %69, %70 : vector<16x128xf32>
    %c0_29 = arith.constant 0 : index
    %c0_30 = arith.constant 0 : index
    %c0_31 = arith.constant 0 : index
    %72 = vector.load %arg9[%c0_29, %c0_30, %c0_31] : memref<1x16x128xf32, #tpu.memory_space<vmem>>, vector<1x16x128xf32>
    %73 = vector.shape_cast %72 : vector<1x16x128xf32> to vector<16x128xf32>
    %74 = vector.shape_cast %71 : vector<16x128xf32> to vector<1x16x128xf32>
    tpu.vector_store %arg9[%c0_29, %c0_30, %c0_31], %74 {strides = array<i32>} : memref<1x16x128xf32, #tpu.memory_space<vmem>>, vector<1x16x128xf32>,
    return
  }
  func.func @transform_1(%arg0: i32, %arg1: i32) -> (i32, i32) {
    %c0_i32 = arith.constant 0 : i32
    %c0_i32_0 = arith.constant 0 : i32
    %c0_i32_1 = arith.constant 0 : i32
    return %c0_i32, %c0_i32_0 : i32, i32
  }
  func.func @transform_2(%arg0: i32, %arg1: i32) -> (i32, i32) {
    %c0_i32 = arith.constant 0 : i32
    %c0_i32_0 = arith.constant 0 : i32
    %c0_i32_1 = arith.constant 0 : i32
    return %c0_i32, %c0_i32_0 : i32, i32
  }
  func.func @transform_3(%arg0: i32, %arg1: i32) -> (i32, i32) {
    %c0_i32 = arith.constant 0 : i32
    %c0_i32_0 = arith.constant 0 : i32
    %c0_i32_1 = arith.constant 0 : i32
    return %c0_i32, %c0_i32_0 : i32, i32
  }
  func.func @transform_4(%arg0: i32, %arg1: i32) -> (i32, i32) {
    %c0_i32 = arith.constant 0 : i32
    %c0_i32_0 = arith.constant 0 : i32
    %c0_i32_1 = arith.constant 0 : i32
    return %c0_i32, %c0_i32_0 : i32, i32
  }
  func.func @transform_5(%arg0: i32, %arg1: i32) -> (i32, i32) {
    %c0_i32 = arith.constant 0 : i32
    %c0_i32_0 = arith.constant 0 : i32
    %c0_i32_1 = arith.constant 0 : i32
    return %c0_i32, %c0_i32_0 : i32, i32
  }
  func.func @transform_6(%arg0: i32, %arg1: i32) -> (i32, i32) {
    %c0_i32 = arith.constant 0 : i32
    %c0_i32_0 = arith.constant 0 : i32
    %c0_i32_1 = arith.constant 0 : i32
    return %c0_i32, %c0_i32_0 : i32, i32
  }
  func.func @transform_7(%arg0: i32, %arg1: i32) -> (i32, i32, i32) {
    %c0_i32 = arith.constant 0 : i32
    %c0_i32_0 = arith.constant 0 : i32
    return %arg0, %arg1, %c0_i32 : i32, i32, i32
  }
}

</mosaic_0001>

<llo_original>
// kernel: tpu_custom_call.1
$region0: #{tpu_custom_call.1}
  #allocation0 [shape = 'u32[]', space=smem, size = 0x4, offset = 0x4, fixed_abs, tag = 'smem constant byte address 0x4 - core index']
  #allocation1 [shape = 'u32[144,128]{1,0:T(1,128)}', space=vmem, size = 0x12000, scoped, tag = 'internal scratch']
  #allocation2 [shape = 'bf16[32,128]{1,0:T(16,128)(2,1)}', space=vmem, size = 0x2000, scoped, tag = 'scratch operand']
  #allocation3 [shape = 's32[1]{0}', space=sflag, size = 0x4, scoped, tag = 'scratch operand']
  #allocation16 [shape = 's32[]', space=sflag, size = 0x4, offset = 0, fixed_abs, tag = 'sflag constant byte address 0x0 - dummy sync flag']
  #allocation17 [shape = 's32[]', space=sflag, size = 0x4, offset = 0, fixed_abs, tag = 'sflag constant byte address 0x0 - dummy sync flag']
  #allocation18 [shape = 'u32[]', space=smem, size = 0x4, offset = 0x44, fixed_abs, tag = 'smem constant byte address 0x44 - assertion arg 0']
  #allocation19 [shape = 'u32[]', space=smem, size = 0x4, offset = 0x48, fixed_abs, tag = 'smem constant byte address 0x48 - assertion arg 1']
  %s0 = inlined_call_operand.hbm [shape: bf16[2,32,128], index: 0, kind: input, shape index: {}]
  %s1 = inlined_call_operand.hbm [shape: bf16[896,128], index: 1, kind: input, shape index: {}]
  %s2 = inlined_call_operand.hbm [shape: bf16[896,128], index: 2, kind: input, shape index: {}]
  %s3 = inlined_call_operand.hbm [shape: bf16[128,128], index: 3, kind: input, shape index: {}]
  %s4 = inlined_call_operand.hbm [shape: f32[2,128], index: 4, kind: input, shape index: {}]
  %s5 = inlined_call_operand.hbm [shape: f32[2,128], index: 5, kind: input, shape index: {}]
  %s6 = inlined_call_operand.hbm [shape: f32[2,128], index: 6, kind: input, shape index: {}]
  %s7 = inlined_call_operand.hbm [shape: f32[2,16,128], index: 7, kind: output, shape index: {}]
  %s8 = sld [smem:[#allocation0]]
  $region85: #{tpu_custom_call.1} parent=0
    _
  %s10 = ssub.s32 1, %s8
  %s11 = scalar_select 0, %s10, %s8
  $region1: #{tpu_custom_call.1} parent=0
    #allocation4 [shape = 'u8[229376]{0}', space=vmem, size = 0x38000, scoped, tag = 'input window, operand 1, single buffered']
    #allocation5 [shape = 's32[2]{0}', space=sflag, size = 0x8, scoped, tag = 'scoped memory for tpu_custom_call.1']
    #allocation6 [shape = 's32[2]{0}', space=sflag, size = 0x8, scoped, tag = 'scoped memory for tpu_custom_call.1']
    #allocation7 [shape = 'u8[229376]{0}', space=vmem, size = 0x38000, scoped, tag = 'input window, operand 2, single buffered']
    #allocation8 [shape = 's32[1]{0}', space=sflag, size = 0x4, scoped, tag = 'scoped memory for tpu_custom_call.1']
    #allocation9 [shape = 'u8[32768]{0}', space=vmem, size = 0x8000, scoped, tag = 'input window, operand 3, single buffered']
    #allocation10 [shape = 'u8[1024]{0}', space=vmem, size = 0x400, scoped, tag = 'input window, operand 4, single buffered']
    #allocation11 [shape = 's32[1]{0}', space=sflag, size = 0x4, scoped, tag = 'scoped memory for tpu_custom_call.1']
    #allocation12 [shape = 'u8[1024]{0}', space=vmem, size = 0x400, scoped, tag = 'input window, operand 5, single buffered']
    #allocation13 [shape = 'u8[1024]{0}', space=vmem, size = 0x400, scoped, tag = 'input window, operand 6, single buffered']
    #allocation14 [shape = 's32[1]{0}', space=sflag, size = 0x4, scoped, tag = 'scoped memory for tpu_custom_call.1']
    #allocation15 [shape = 'u8[16384]{0}', space=vmem, size = 0x4000, scoped, tag = 'output window, operand 0']
    %12 = vsyncpa [#allocation5], 0
    %13 = vsyncpa [#allocation8], 0
    %14 = vsyncpa [#allocation11], 0
    %15 = vsyncpa [#allocation14], 0
    %16 = vsyncpa [#allocation6], 0
    %s17 = scalar_lea.sflag [#allocation6], 1
    %18 = vsyncpa %s17, 0
    loop: start=0, step=1, limit=4
    $region2: #{tpu_custom_call.1} parent=1 // loop_pre_header
      _
    $region3: #{tpu_custom_call.1} parent=1 // loop_header
      %s20 = sphi 0, %s24
      %p21 = scmp.ge.s32.totalorder %s20, 4
      %s27 = sphi 0, %s39
      %s28 = sphi 0, %s35
      %s29 = sphi 0, %s27
      %s30 = sphi 0, %s28
      %s31 = sphi 0, %s29
      %s32 = sphi 0, %s30
      %s40 = sphi 0, %s40
      %s42 = sphi 0, %s40
      %s43 = sphi 0, %s42
      %s57 = sphi 0, %s43
      %s61 = sphi 0, %s61
      %s63 = sphi 0, %s61
      %s64 = sphi 0, %s63
      %s78 = sphi 0, %s64
      %s82 = sphi 0, %s82
      %s84 = sphi 0, %s82
      %s85 = sphi 0, %s84
      %s99 = sphi 0, %s85
      %s103 = sphi 0, %s103
      %s105 = sphi 0, %s103
      %s106 = sphi 0, %s105
      %s120 = sphi 0, %s106
      %s124 = sphi 0, %s124
      %s126 = sphi 0, %s124
      %s127 = sphi 0, %s126
      %s141 = sphi 0, %s127
      %s145 = sphi 0, %s145
      %s147 = sphi 0, %s145
      %s148 = sphi 0, %s147
      %s162 = sphi 0, %s148
      %s170 = sphi 0, %s172
      %s173 = sphi 0, %s170
      %s174 = sphi 0, %s173
      %s190 = sphi 0, %s174
    $region4: #{tpu_custom_call.1} parent=1 // loop_header_branch
      %23 = sbr.rel (%p21) target = $region8
    $region5: #{tpu_custom_call.1} parent=1 // loop_body
      %s25 = ssub.s32 %s20, 1
      %s26 = ssub.s32 %s20, 2
      %s33 = sadd.s32 1, %s28
      %p34 = scmp.ge.s32.totalorder %s33, 1
      %s35 = scalar_select %p34, 0, %s33
      %s36 = sadd.s32 1, %s27
      %s37 = scalar_select %p34, %s36, %s27
      %p38 = scmp.ge.s32.totalorder %s37, 2
      %s39 = scalar_select %p38, 0, %s37
      %s41 = sadd.s32 %s40, 1
      %p44 = scmp.eq.s32.totalorder %s20, 1
      %p45 = scmp.ne.s32.totalorder %s40, %s42
      %p46 = scmp.eq.s32.totalorder %s20, 0
      %p47 = por %p45, %p46
      %p48 = scmp.ne.s32.totalorder %s40, %s42
      %p49 = scmp.eq.s32.totalorder %s25, 1
      %p50 = por %p48, %p49
      %p51 = scmp.ne.s32.totalorder %s42, %s43
      %p52 = scmp.eq.s32.totalorder %s25, 0
      %p53 = por %p51, %p52
      %p54 = scmp.ne.s32.totalorder %s42, %s43
      %p55 = scmp.eq.s32.totalorder %s26, 1
      %p56 = por %p54, %p55
      %p58 = scmp.ne.s32.totalorder %s43, %s57
      %p59 = scmp.eq.s32.totalorder %s26, 0
      %p60 = por %p58, %p59
      %s62 = sadd.s32 %s61, 1
      %p65 = scmp.eq.s32.totalorder %s20, 1
      %p66 = scmp.ne.s32.totalorder %s61, %s63
      %p67 = scmp.eq.s32.totalorder %s20, 0
      %p68 = por %p66, %p67
      %p69 = scmp.ne.s32.totalorder %s61, %s63
      %p70 = scmp.eq.s32.totalorder %s25, 1
      %p71 = por %p69, %p70
      %p72 = scmp.ne.s32.totalorder %s63, %s64
      %p73 = scmp.eq.s32.totalorder %s25, 0
      %p74 = por %p72, %p73
      %p75 = scmp.ne.s32.totalorder %s63, %s64
      %p76 = scmp.eq.s32.totalorder %s26, 1
      %p77 = por %p75, %p76
      %p79 = scmp.ne.s32.totalorder %s64, %s78
      %p80 = scmp.eq.s32.totalorder %s26, 0
      %p81 = por %p79, %p80
      %s83 = sadd.s32 %s82, 1
      %p86 = scmp.eq.s32.totalorder %s20, 1
      %p87 = scmp.ne.s32.totalorder %s82, %s84
      %p88 = scmp.eq.s32.totalorder %s20, 0
      %p89 = por %p87, %p88
      %p90 = scmp.ne.s32.totalorder %s82, %s84
      %p91 = scmp.eq.s32.totalorder %s25, 1
      %p92 = por %p90, %p91
      %p93 = scmp.ne.s32.totalorder %s84, %s85
      %p94 = scmp.eq.s32.totalorder %s25, 0
      %p95 = por %p93, %p94
      %p96 = scmp.ne.s32.totalorder %s84, %s85
      %p97 = scmp.eq.s32.totalorder %s26, 1
      %p98 = por %p96, %p97
      %p100 = scmp.ne.s32.totalorder %s85, %s99
      %p101 = scmp.eq.s32.totalorder %s26, 0
      %p102 = por %p100, %p101
      %s104 = sadd.s32 %s103, 1
      %p107 = scmp.eq.s32.totalorder %s20, 1
      %p108 = scmp.ne.s32.totalorder %s103, %s105
      %p109 = scmp.eq.s32.totalorder %s20, 0
      %p110 = por %p108, %p109
      %p111 = scmp.ne.s32.totalorder %s103, %s105
      %p112 = scmp.eq.s32.totalorder %s25, 1
      %p113 = por %p111, %p112
      %p114 = scmp.ne.s32.totalorder %s105, %s106
      %p115 = scmp.eq.s32.totalorder %s25, 0
      %p116 = por %p114, %p115
      %p117 = scmp.ne.s32.totalorder %s105, %s106
      %p118 = scmp.eq.s32.totalorder %s26, 1
      %p119 = por %p117, %p118
      %p121 = scmp.ne.s32.totalorder %s106, %s120
      %p122 = scmp.eq.s32.totalorder %s26, 0
      %p123 = por %p121, %p122
      %s125 = sadd.s32 %s124, 1
      %p128 = scmp.eq.s32.totalorder %s20, 1
      %p129 = scmp.ne.s32.totalorder %s124, %s126
      %p130 = scmp.eq.s32.totalorder %s20, 0
      %p131 = por %p129, %p130
      %p132 = scmp.ne.s32.totalorder %s124, %s126
      %p133 = scmp.eq.s32.totalorder %s25, 1
      %p134 = por %p132, %p133
      %p135 = scmp.ne.s32.totalorder %s126, %s127
      %p136 = scmp.eq.s32.totalorder %s25, 0
      %p137 = por %p135, %p136
      %p138 = scmp.ne.s32.totalorder %s126, %s127
      %p139 = scmp.eq.s32.totalorder %s26, 1
      %p140 = por %p138, %p139
      %p142 = scmp.ne.s32.totalorder %s127, %s141
      %p143 = scmp.eq.s32.totalorder %s26, 0
      %p144 = por %p142, %p143
      %s146 = sadd.s32 %s145, 1
      %p149 = scmp.eq.s32.totalorder %s20, 1
      %p150 = scmp.ne.s32.totalorder %s145, %s147
      %p151 = scmp.eq.s32.totalorder %s20, 0
      %p152 = por %p150, %p151
      %p153 = scmp.ne.s32.totalorder %s145, %s147
      %p154 = scmp.eq.s32.totalorder %s25, 1
      %p155 = por %p153, %p154
      %p156 = scmp.ne.s32.totalorder %s147, %s148
      %p157 = scmp.eq.s32.totalorder %s25, 0
      %p158 = por %p156, %p157
      %p159 = scmp.ne.s32.totalorder %s147, %s148
      %p160 = scmp.eq.s32.totalorder %s26, 1
      %p161 = por %p159, %p160
      %p163 = scmp.ne.s32.totalorder %s148, %s162
      %p164 = scmp.eq.s32.totalorder %s26, 0
      %p165 = por %p163, %p164
      %s166 = ssub.s32 %s27, %s39
      %s167 = ssub.s32 %s28, %s35
      %s168 = sor.u32 %s166, %s167
      %p169 = scmp.eq.s32.totalorder %s168, 0
      %s171 = sadd.s32 %s170, 1
      %s172 = scalar_select %p169, %s170, %s171
      %p175 = pneg %p169
      %p176 = scmp.eq.s32.totalorder %s20, 1
      %p177 = por %p175, %p176
      %p178 = scmp.ne.s32.totalorder %s170, %s173
      %p179 = scmp.eq.s32.totalorder %s20, 0
      %p180 = por %p178, %p179
      %p181 = scmp.ne.s32.totalorder %s170, %s173
      %p182 = scmp.eq.s32.totalorder %s25, 1
      %p183 = por %p181, %p182
      %p184 = scmp.ne.s32.totalorder %s173, %s174
      %p185 = scmp.eq.s32.totalorder %s25, 0
      %p186 = por %p184, %p185
      %p187 = scmp.ne.s32.totalorder %s173, %s174
      %p188 = scmp.eq.s32.totalorder %s26, 1
      %p189 = por %p187, %p188
      %p191 = scmp.ne.s32.totalorder %s174, %s190
      %p192 = scmp.eq.s32.totalorder %s26, 0
      %p193 = por %p191, %p192
      %p194 = scmp.le.s32.totalorder 1, %s20
      %p195 = scmp.lt.s32.totalorder %s20, 3
      %p196 = pnand %p194, %p195
      %p197 = pneg %p196
      // Predicated region
      $region9: #{tpu_custom_call.1} parent=5 // pred_check
        _
      $region10: #{tpu_custom_call.1} parent=5 // pred_check_branch
        %199 = sbr.rel (%p196) target = $region12
      $region11: #{tpu_custom_call.1} parent=5 // pred_region
        %s200 = ssub.s32 %s20, 1
        // Predicated region
        $region13: #{tpu_custom_call.1} parent=11 // pred_check
          %p201 = pneg %p53
        $region14: #{tpu_custom_call.1} parent=11 // pred_check_branch
          %203 = sbr.rel (%p201) target = $region16
        $region15: #{tpu_custom_call.1} parent=11 // pred_region
          %s205 = ssub.s32 7168, 7168
          %206 = vsyncadd [#allocation5], %s205
          %s207 = sshll.u32 [#allocation4], 4
          %s208 = int_to_ptr.vmem [resolvable:$true] %s207
          %213 = dma.hbm_to_vmem [thread:$0]  %s1, 7168, %s208, [#allocation5], 64, 64, 4
        $region16: #{tpu_custom_call.1} parent=11 // pred_fallthru
          _
        // Predicated region
        $region17: #{tpu_custom_call.1} parent=11 // pred_check
          %p214 = pneg %p74
        $region18: #{tpu_custom_call.1} parent=11 // pred_check_branch
          %216 = sbr.rel (%p214) target = $region20
        $region19: #{tpu_custom_call.1} parent=11 // pred_region
          %s218 = ssub.s32 7168, 7168
          %219 = vsyncadd [#allocation8], %s218
          %s220 = sshll.u32 [#allocation7], 4
          %s221 = int_to_ptr.vmem [resolvable:$true] %s220
          %226 = dma.hbm_to_vmem [thread:$0]  %s2, 7168, %s221, [#allocation8], 64, 64, 4
        $region20: #{tpu_custom_call.1} parent=11 // pred_fallthru
          _
        // Predicated region
        $region21: #{tpu_custom_call.1} parent=11 // pred_check
          %p227 = pneg %p95
        $region22: #{tpu_custom_call.1} parent=11 // pred_check_branch
          %229 = sbr.rel (%p227) target = $region24
        $region23: #{tpu_custom_call.1} parent=11 // pred_region
          %s231 = ssub.s32 1024, 1024
          %232 = vsyncadd [#allocation8], %s231
          %s233 = sshll.u32 [#allocation9], 4
          %s234 = int_to_ptr.vmem [resolvable:$true] %s233
          %239 = dma.hbm_to_vmem [thread:$0]  %s3, 1024, %s234, [#allocation8], 64, 64, 4
        $region24: #{tpu_custom_call.1} parent=11 // pred_fallthru
          _
        // Predicated region
        $region25: #{tpu_custom_call.1} parent=11 // pred_check
          %p240 = pneg %p116
        $region26: #{tpu_custom_call.1} parent=11 // pred_check_branch
          %242 = sbr.rel (%p240) target = $region28
        $region27: #{tpu_custom_call.1} parent=11 // pred_region
          %s244 = ssub.s32 32, 32
          %245 = vsyncadd [#allocation11], %s244
          %s247 = sshll.u32 [#allocation10], 4
          %s248 = int_to_ptr.vmem [resolvable:$true] %s247
          %250 = dma.hbm_to_vmem [thread:$0]  %s4, 32, %s248, [#allocation11]
        $region28: #{tpu_custom_call.1} parent=11 // pred_fallthru
          _
        // Predicated region
        $region29: #{tpu_custom_call.1} parent=11 // pred_check
          %p251 = pneg %p137
        $region30: #{tpu_custom_call.1} parent=11 // pred_check_branch
          %253 = sbr.rel (%p251) target = $region32
        $region31: #{tpu_custom_call.1} parent=11 // pred_region
          %s255 = ssub.s32 32, 32
          %256 = vsyncadd [#allocation11], %s255
          %s258 = sshll.u32 [#allocation12], 4
          %s259 = int_to_ptr.vmem [resolvable:$true] %s258
          %261 = dma.hbm_to_vmem [thread:$0]  %s5, 32, %s259, [#allocation11]
        $region32: #{tpu_custom_call.1} parent=11 // pred_fallthru
          _
        // Predicated region
        $region33: #{tpu_custom_call.1} parent=11 // pred_check
          %p262 = pneg %p158
        $region34: #{tpu_custom_call.1} parent=11 // pred_check_branch
          %264 = sbr.rel (%p262) target = $region36
        $region35: #{tpu_custom_call.1} parent=11 // pred_region
          %s266 = ssub.s32 32, 32
          %267 = vsyncadd [#allocation14], %s266
          %s269 = sshll.u32 [#allocation13], 4
          %s270 = int_to_ptr.vmem [resolvable:$true] %s269
          %272 = dma.hbm_to_vmem [thread:$0]  %s6, 32, %s270, [#allocation14]
        $region36: #{tpu_custom_call.1} parent=11 // pred_fallthru
          _
      $region12: #{tpu_custom_call.1} parent=5 // pred_fallthru
        _
      %p273 = scmp.lt.s32.totalorder %s20, 2
      // Predicated region
      $region37: #{tpu_custom_call.1} parent=5 // pred_check
        %p274 = pneg %p273
      $region38: #{tpu_custom_call.1} parent=5 // pred_check_branch
        %276 = sbr.rel (%p274) target = $region40
      $region39: #{tpu_custom_call.1} parent=5 // pred_region
        _
      $region40: #{tpu_custom_call.1} parent=5 // pred_fallthru
        _
      %p277 = scmp.le.s32.totalorder 1, %s20
      %p278 = scmp.lt.s32.totalorder %s20, 3
      %p279 = pnand %p277, %p278
      %p280 = pneg %p279
      // Predicated region
      $region41: #{tpu_custom_call.1} parent=5 // pred_check
        _
      $region42: #{tpu_custom_call.1} parent=5 // pred_check_branch
        %282 = sbr.rel (%p279) target = $region44
      $region43: #{tpu_custom_call.1} parent=5 // pred_region
        %s283 = ssub.s32 %s20, 1
        // Predicated region
        $region45: #{tpu_custom_call.1} parent=43 // pred_check
          %p284 = pneg %p53
        $region46: #{tpu_custom_call.1} parent=43 // pred_check_branch
          %286 = sbr.rel (%p284) target = $region48
        $region47: #{tpu_custom_call.1} parent=43 // pred_region
          %287 = dma.done [#allocation5], 7168
        $region48: #{tpu_custom_call.1} parent=43 // pred_fallthru
          _
        // Predicated region
        $region49: #{tpu_custom_call.1} parent=43 // pred_check
          %p288 = pneg %p74
        $region50: #{tpu_custom_call.1} parent=43 // pred_check_branch
          %290 = sbr.rel (%p288) target = $region52
        $region51: #{tpu_custom_call.1} parent=43 // pred_region
          %291 = dma.done [#allocation8], 7168
        $region52: #{tpu_custom_call.1} parent=43 // pred_fallthru
          _
        // Predicated region
        $region53: #{tpu_custom_call.1} parent=43 // pred_check
          %p292 = pneg %p95
        $region54: #{tpu_custom_call.1} parent=43 // pred_check_branch
          %294 = sbr.rel (%p292) target = $region56
        $region55: #{tpu_custom_call.1} parent=43 // pred_region
          %295 = dma.done [#allocation8], 1024
        $region56: #{tpu_custom_call.1} parent=43 // pred_fallthru
          _
        // Predicated region
        $region57: #{tpu_custom_call.1} parent=43 // pred_check
          %p296 = pneg %p116
        $region58: #{tpu_custom_call.1} parent=43 // pred_check_branch
          %298 = sbr.rel (%p296) target = $region60
        $region59: #{tpu_custom_call.1} parent=43 // pred_region
          %299 = dma.done [#allocation11], 32
        $region60: #{tpu_custom_call.1} parent=43 // pred_fallthru
          _
        // Predicated region
        $region61: #{tpu_custom_call.1} parent=43 // pred_check
          %p300 = pneg %p137
        $region62: #{tpu_custom_call.1} parent=43 // pred_check_branch
          %302 = sbr.rel (%p300) target = $region64
        $region63: #{tpu_custom_call.1} parent=43 // pred_region
          %303 = dma.done [#allocation11], 32
        $region64: #{tpu_custom_call.1} parent=43 // pred_fallthru
          _
        // Predicated region
        $region65: #{tpu_custom_call.1} parent=43 // pred_check
          %p304 = pneg %p158
        $region66: #{tpu_custom_call.1} parent=43 // pred_check_branch
          %306 = sbr.rel (%p304) target = $region68
        $region67: #{tpu_custom_call.1} parent=43 // pred_region
          %307 = dma.done [#allocation14], 32
        $region68: #{tpu_custom_call.1} parent=43 // pred_fallthru
          _
        %p308 = pneg %p53
        %p309 = pneg %p50
        %p310 = pneg %p74
        %p311 = pneg %p71
        %p312 = pneg %p95
        %p313 = pneg %p92
        %p314 = pneg %p116
        %p315 = pneg %p113
        %p316 = pneg %p137
        %p317 = pneg %p134
        %p318 = pneg %p158
        %p319 = pneg %p155
        %p320 = pneg %p186
        %p321 = pneg %p183
        %s322 = sand.u32 %s173, 1
        %s323 = scalar_lea.sflag [#allocation6], %s322
        %s324 = sand.u32 %s173, 1
        %s325 = smul.addr %s324, 16
        %s326 = scalar_lea.vmem [#allocation15], %s325
        %s327 = smul.u32 2, %s30
        %s329 = smul.u32 %s30, 16
        %s330 = sshra.s32 %s329, 3
        %s331 = sand.u32 %s329, 7
        %s332 = smul.u32 %s29, 4
        %s333 = sadd.s32 %s330, %s332
        %s334 = smul.addr %s333, 64
        %s335 = scalar_lea.hbm %s0, %s334
        // Predicated region
        $region69: #{tpu_custom_call.1} parent=43 // pred_check
          _
        $region70: #{tpu_custom_call.1} parent=43 // pred_check_branch
          %337 = sbr.rel target = $region72
        $region71: #{tpu_custom_call.1} parent=43 // pred_region
          %338 = sst [smem:[#allocation18]] [#allocation17]
          %339 = sst [smem:[#allocation19]] [#allocation16]
        $region72: #{tpu_custom_call.1} parent=43 // pred_fallthru
          _
        %341 = shalt.err (0)
        %s343 = sshll.u32 [#allocation2], 4
        %s344 = int_to_ptr.vmem [resolvable:$true] %s343
        %346 = dma.hbm_to_vmem [thread:$0]  %s335, 256, %s344, [#allocation3]
        %s347 = smul.u32 4, 4
        %s348 = smul.u32 %s347, 1
        %s349 = sshll.u32 %s348, 4
        %350 = dma.done [#allocation3], %s349
        %v351 = vld [vmem:[#allocation2] sm:$0xff]
        %v352 = vld [vmem:[#allocation2 + $0x8] sm:$0xff]
        %vm353 = vsmask.f32 7424
        %v355 = vshrl.u32 %v351, 16
        %v357 = vshll.u32 %v351, 16
        %v359 = vrot.slane %v357, 1
        %v360 = vor.u32 %v355, %v359
        %v362 = vshll.u32 %v352, 16
        %v364 = vrot.slane %v362, 1
        %v365 = vsel %vm353, %v360, %v364
        %v366 = vshrl.u32 %v352, 16
        %v368 = vor.u32 %v366, %v364
        %vm373 = vcmask 1046528
        %v374 = vrot.slane %v351, 1
        %v375 = vrot.slane %v352, 1
        %v376 = vsel %vm373, %v374, %v375
        %vm379 = vsmask.f32 6400
        %v380 = vrot.slane %v355, 1
        %v381 = vrot.slane %v357, 2
        %v382 = vor.u32 %v380, %v381
        %v383 = vrot.slane %v366, 1
        %v384 = vrot.slane %v362, 2
        %v385 = vor.u32 %v383, %v384
        %v386 = vsel %vm379, %v382, %v385
        %vm389 = vcmask 1045504
        %v390 = vrot.slane %v351, 2
        %v391 = vrot.slane %v352, 2
        %v392 = vsel %vm389, %v390, %v391
        %vm395 = vsmask.f32 5376
        %v396 = vrot.slane %v355, 2
        %v397 = vrot.slane %v357, 3
        %v398 = vor.u32 %v396, %v397
        %v399 = vrot.slane %v366, 2
        %v400 = vrot.slane %v362, 3
        %v401 = vor.u32 %v399, %v400
        %v402 = vsel %vm395, %v398, %v401
        %vm405 = vcmask 1044480
        %v406 = vrot.slane %v351, 3
        %v407 = vrot.slane %v352, 3
        %v408 = vsel %vm405, %v406, %v407
        %v411 = vld [vmem:[#allocation4] sm:$0xf]
        %v412 = vld [vmem:[#allocation4 + $0x4] sm:$0xf]
        %v413 = vld [vmem:[#allocation4 + $0x8] sm:$0xf]
        %v414 = vld [vmem:[#allocation4 + $0xc] sm:$0xf]
        %v415 = vld [vmem:[#allocation4 + $0x10] sm:$0xf]
        %v416 = vld [vmem:[#allocation4 + $0x14] sm:$0xf]
        %v417 = vld [vmem:[#allocation4 + $0x18] sm:$0xf]
        %v418 = vld [vmem:[#allocation4 + $0x1c] sm:$0xf]
        %v419 = vld [vmem:[#allocation4 + $0x20] sm:$0xf]
        %v420 = vld [vmem:[#allocation4 + $0x24] sm:$0xf]
        %v421 = vld [vmem:[#allocation4 + $0x28] sm:$0xf]
        %v422 = vld [vmem:[#allocation4 + $0x2c] sm:$0xf]
        %v423 = vld [vmem:[#allocation4 + $0x30] sm:$0xf]
        %v424 = vld [vmem:[#allocation4 + $0x34] sm:$0xf]
        %v425 = vld [vmem:[#allocation4 + $0x38] sm:$0xf]
        %v426 = vld [vmem:[#allocation4 + $0x3c] sm:$0xf]
        %v427 = vld [vmem:[#allocation4 + $0x40] sm:$0xf]
        %v428 = vld [vmem:[#allocation4 + $0x44] sm:$0xf]
        %v429 = vld [vmem:[#allocation4 + $0x48] sm:$0xf]
        %v430 = vld [vmem:[#allocation4 + $0x4c] sm:$0xf]
        %v431 = vld [vmem:[#allocation4 + $0x50] sm:$0xf]
        %v432 = vld [vmem:[#allocation4 + $0x54] sm:$0xf]
        %v433 = vld [vmem:[#allocation4 + $0x58] sm:$0xf]
        %v434 = vld [vmem:[#allocation4 + $0x5c] sm:$0xf]
        %v435 = vld [vmem:[#allocation4 + $0x60] sm:$0xf]
        %v436 = vld [vmem:[#allocation4 + $0x64] sm:$0xf]
        %v437 = vld [vmem:[#allocation4 + $0x68] sm:$0xf]
        %v438 = vld [vmem:[#allocation4 + $0x6c] sm:$0xf]
        %v439 = vld [vmem:[#allocation4 + $0x70] sm:$0xf]
        %v440 = vld [vmem:[#allocation4 + $0x74] sm:$0xf]
        %v441 = vld [vmem:[#allocation4 + $0x78] sm:$0xf]
        %v442 = vld [vmem:[#allocation4 + $0x7c] sm:$0xf]
        %v443 = vld [vmem:[#allocation4 + $0x80] sm:$0xf]
        %v444 = vld [vmem:[#allocation4 + $0x84] sm:$0xf]
        %v445 = vld [vmem:[#allocation4 + $0x88] sm:$0xf]
        %v446 = vld [vmem:[#allocation4 + $0x8c] sm:$0xf]
        %v447 = vld [vmem:[#allocation4 + $0x90] sm:$0xf]
        %v448 = vld [vmem:[#allocation4 + $0x94] sm:$0xf]
        %v449 = vld [vmem:[#allocation4 + $0x98] sm:$0xf]
        %v450 = vld [vmem:[#allocation4 + $0x9c] sm:$0xf]
        %v451 = vld [vmem:[#allocation4 + $0xa0] sm:$0xf]
        %v452 = vld [vmem:[#allocation4 + $0xa4] sm:$0xf]
        %v453 = vld [vmem:[#allocation4 + $0xa8] sm:$0xf]
        %v454 = vld [vmem:[#allocation4 + $0xac] sm:$0xf]
        %v455 = vld [vmem:[#allocation4 + $0xb0] sm:$0xf]
        %v456 = vld [vmem:[#allocation4 + $0xb4] sm:$0xf]
        %v457 = vld [vmem:[#allocation4 + $0xb8] sm:$0xf]
        %v458 = vld [vmem:[#allocation4 + $0xbc] sm:$0xf]
        %v459 = vld [vmem:[#allocation4 + $0xc0] sm:$0xf]
        %v460 = vld [vmem:[#allocation4 + $0xc4] sm:$0xf]
        %v461 = vld [vmem:[#allocation4 + $0xc8] sm:$0xf]
        %v462 = vld [vmem:[#allocation4 + $0xcc] sm:$0xf]
        %v463 = vld [vmem:[#allocation4 + $0xd0] sm:$0xf]
        %v464 = vld [vmem:[#allocation4 + $0xd4] sm:$0xf]
        %v465 = vld [vmem:[#allocation4 + $0xd8] sm:$0xf]
        %v466 = vld [vmem:[#allocation4 + $0xdc] sm:$0xf]
        %v467 = vld [vmem:[#allocation4 + $0xe0] sm:$0xf]
        %v468 = vld [vmem:[#allocation4 + $0xe4] sm:$0xf]
        %v469 = vld [vmem:[#allocation4 + $0xe8] sm:$0xf]
        %v470 = vld [vmem:[#allocation4 + $0xec] sm:$0xf]
        %v471 = vld [vmem:[#allocation4 + $0xf0] sm:$0xf]
        %v472 = vld [vmem:[#allocation4 + $0xf4] sm:$0xf]
        %v473 = vld [vmem:[#allocation4 + $0xf8] sm:$0xf]
        %v474 = vld [vmem:[#allocation4 + $0xfc] sm:$0xf]
        %v475 = vld [vmem:[#allocation4 + $0x100] sm:$0xf]
        %v476 = vld [vmem:[#allocation4 + $0x104] sm:$0xf]
        %v477 = vld [vmem:[#allocation4 + $0x108] sm:$0xf]
        %v478 = vld [vmem:[#allocation4 + $0x10c] sm:$0xf]
        %v479 = vld [vmem:[#allocation4 + $0x110] sm:$0xf]
        %v480 = vld [vmem:[#allocation4 + $0x114] sm:$0xf]
        %v481 = vld [vmem:[#allocation4 + $0x118] sm:$0xf]
        %v482 = vld [vmem:[#allocation4 + $0x11c] sm:$0xf]
        %v483 = vld [vmem:[#allocation4 + $0x120] sm:$0xf]
        %v484 = vld [vmem:[#allocation4 + $0x124] sm:$0xf]
        %v485 = vld [vmem:[#allocation4 + $0x128] sm:$0xf]
        %v486 = vld [vmem:[#allocation4 + $0x12c] sm:$0xf]
        %v487 = vld [vmem:[#allocation4 + $0x130] sm:$0xf]
        %v488 = vld [vmem:[#allocation4 + $0x134] sm:$0xf]
        %v489 = vld [vmem:[#allocation4 + $0x138] sm:$0xf]
        %v490 = vld [vmem:[#allocation4 + $0x13c] sm:$0xf]
        %v491 = vld [vmem:[#allocation4 + $0x140] sm:$0xf]
        %v492 = vld [vmem:[#allocation4 + $0x144] sm:$0xf]
        %v493 = vld [vmem:[#allocation4 + $0x148] sm:$0xf]
        %v494 = vld [vmem:[#allocation4 + $0x14c] sm:$0xf]
        %v495 = vld [vmem:[#allocation4 + $0x150] sm:$0xf]
        %v496 = vld [vmem:[#allocation4 + $0x154] sm:$0xf]
        %v497 = vld [vmem:[#allocation4 + $0x158] sm:$0xf]
        %v498 = vld [vmem:[#allocation4 + $0x15c] sm:$0xf]
        %v499 = vld [vmem:[#allocation4 + $0x160] sm:$0xf]
        %v500 = vld [vmem:[#allocation4 + $0x164] sm:$0xf]
        %v501 = vld [vmem:[#allocation4 + $0x168] sm:$0xf]
        %v502 = vld [vmem:[#allocation4 + $0x16c] sm:$0xf]
        %v503 = vld [vmem:[#allocation4 + $0x170] sm:$0xf]
        %v504 = vld [vmem:[#allocation4 + $0x174] sm:$0xf]
        %v505 = vld [vmem:[#allocation4 + $0x178] sm:$0xf]
        %v506 = vld [vmem:[#allocation4 + $0x17c] sm:$0xf]
        %v507 = vld [vmem:[#allocation4 + $0x180] sm:$0xf]
        %v508 = vld [vmem:[#allocation4 + $0x184] sm:$0xf]
        %v509 = vld [vmem:[#allocation4 + $0x188] sm:$0xf]
        %v510 = vld [vmem:[#allocation4 + $0x18c] sm:$0xf]
        %v511 = vld [vmem:[#allocation4 + $0x190] sm:$0xf]
        %v512 = vld [vmem:[#allocation4 + $0x194] sm:$0xf]
        %v513 = vld [vmem:[#allocation4 + $0x198] sm:$0xf]
        %v514 = vld [vmem:[#allocation4 + $0x19c] sm:$0xf]
        %v515 = vld [vmem:[#allocation4 + $0x1a0] sm:$0xf]
        %v516 = vld [vmem:[#allocation4 + $0x1a4] sm:$0xf]
        %v517 = vld [vmem:[#allocation4 + $0x1a8] sm:$0xf]
        %v518 = vld [vmem:[#allocation4 + $0x1ac] sm:$0xf]
        %v519 = vld [vmem:[#allocation4 + $0x1b0] sm:$0xf]
        %v520 = vld [vmem:[#allocation4 + $0x1b4] sm:$0xf]
        %v521 = vld [vmem:[#allocation4 + $0x1b8] sm:$0xf]
        %v522 = vld [vmem:[#allocation4 + $0x1bc] sm:$0xf]
        %v635 = vunpack.c.l.b16 %v411
        %v636 = vunpack.c.l.b16 %v412
        %v637 = vunpack.c.l.b16 %v413
        %v638 = vunpack.c.l.b16 %v414
        %v639 = vunpack.c.l.b16 %v415
        %v640 = vunpack.c.l.b16 %v416
        %v641 = vunpack.c.l.b16 %v417
        %v642 = vunpack.c.l.b16 %v418
        %v643 = vunpack.c.l.b16 %v419
        %v644 = vunpack.c.l.b16 %v420
        %v645 = vunpack.c.l.b16 %v421
        %v646 = vunpack.c.l.b16 %v422
        %v647 = vunpack.c.l.b16 %v423
        %v648 = vunpack.c.l.b16 %v424
        %v649 = vunpack.c.l.b16 %v425
        %v650 = vunpack.c.l.b16 %v426
        %v651 = vunpack.c.l.b16 %v427
        %v652 = vunpack.c.l.b16 %v428
        %v653 = vunpack.c.l.b16 %v429
        %v654 = vunpack.c.l.b16 %v430
        %v655 = vunpack.c.l.b16 %v431
        %v656 = vunpack.c.l.b16 %v432
        %v657 = vunpack.c.l.b16 %v433
        %v658 = vunpack.c.l.b16 %v434
        %v659 = vunpack.c.l.b16 %v435
        %v660 = vunpack.c.l.b16 %v436
        %v661 = vunpack.c.l.b16 %v437
        %v662 = vunpack.c.l.b16 %v438
        %v663 = vunpack.c.l.b16 %v439
        %v664 = vunpack.c.l.b16 %v440
        %v665 = vunpack.c.l.b16 %v441
        %v666 = vunpack.c.l.b16 %v442
        %v667 = vunpack.c.l.b16 %v443
        %v668 = vunpack.c.l.b16 %v444
        %v669 = vunpack.c.l.b16 %v445
        %v670 = vunpack.c.l.b16 %v446
        %v671 = vunpack.c.l.b16 %v447
        %v672 = vunpack.c.l.b16 %v448
        %v673 = vunpack.c.l.b16 %v449
        %v674 = vunpack.c.l.b16 %v450
        %v675 = vunpack.c.l.b16 %v451
        %v676 = vunpack.c.l.b16 %v452
        %v677 = vunpack.c.l.b16 %v453
        %v678 = vunpack.c.l.b16 %v454
        %v679 = vunpack.c.l.b16 %v455
        %v680 = vunpack.c.l.b16 %v456
        %v681 = vunpack.c.l.b16 %v457
        %v682 = vunpack.c.l.b16 %v458
        %v683 = vunpack.c.l.b16 %v459
        %v684 = vunpack.c.l.b16 %v460
        %v685 = vunpack.c.l.b16 %v461
        %v686 = vunpack.c.l.b16 %v462
        %v687 = vunpack.c.l.b16 %v463
        %v688 = vunpack.c.l.b16 %v464
        %v689 = vunpack.c.l.b16 %v465
        %v690 = vunpack.c.l.b16 %v466
        %v691 = vunpack.c.l.b16 %v467
        %v692 = vunpack.c.l.b16 %v468
        %v693 = vunpack.c.l.b16 %v469
        %v694 = vunpack.c.l.b16 %v470
        %v695 = vunpack.c.l.b16 %v471
        %v696 = vunpack.c.l.b16 %v472
        %v697 = vunpack.c.l.b16 %v473
        %v698 = vunpack.c.l.b16 %v474
        %v699 = vunpack.c.l.b16 %v475
        %v700 = vunpack.c.l.b16 %v476
        %v701 = vunpack.c.l.b16 %v477
        %v702 = vunpack.c.l.b16 %v478
        %v703 = vunpack.c.l.b16 %v479
        %v704 = vunpack.c.l.b16 %v480
        %v705 = vunpack.c.l.b16 %v481
        %v706 = vunpack.c.l.b16 %v482
        %v707 = vunpack.c.l.b16 %v483
        %v708 = vunpack.c.l.b16 %v484
        %v709 = vunpack.c.l.b16 %v485
        %v710 = vunpack.c.l.b16 %v486
        %v711 = vunpack.c.l.b16 %v487
        %v712 = vunpack.c.l.b16 %v488
        %v713 = vunpack.c.l.b16 %v489
        %v714 = vunpack.c.l.b16 %v490
        %v715 = vunpack.c.l.b16 %v491
        %v716 = vunpack.c.l.b16 %v492
        %v717 = vunpack.c.l.b16 %v493
        %v718 = vunpack.c.l.b16 %v494
        %v719 = vunpack.c.l.b16 %v495
        %v720 = vunpack.c.l.b16 %v496
        %v721 = vunpack.c.l.b16 %v497
        %v722 = vunpack.c.l.b16 %v498
        %v723 = vunpack.c.l.b16 %v499
        %v724 = vunpack.c.l.b16 %v500
        %v725 = vunpack.c.l.b16 %v501
        %v726 = vunpack.c.l.b16 %v502
        %v727 = vunpack.c.l.b16 %v503
        %v728 = vunpack.c.l.b16 %v504
        %v729 = vunpack.c.l.b16 %v505
        %v730 = vunpack.c.l.b16 %v506
        %v731 = vunpack.c.l.b16 %v507
        %v732 = vunpack.c.l.b16 %v508
        %v733 = vunpack.c.l.b16 %v509
        %v734 = vunpack.c.l.b16 %v510
        %v735 = vunpack.c.l.b16 %v511
        %v736 = vunpack.c.l.b16 %v512
        %v737 = vunpack.c.l.b16 %v513
        %v738 = vunpack.c.l.b16 %v514
        %v739 = vunpack.c.l.b16 %v515
        %v740 = vunpack.c.l.b16 %v516
        %v741 = vunpack.c.l.b16 %v517
        %v742 = vunpack.c.l.b16 %v518
        %v743 = vunpack.c.l.b16 %v519
        %v744 = vunpack.c.l.b16 %v520
        %v745 = vunpack.c.l.b16 %v521
        %v746 = vunpack.c.l.b16 %v522
        %v747 = vpack.c.b16 %v636, %v635
        %v748 = vpack.c.b16 %v638, %v637
        %v749 = vpack.c.b16 %v640, %v639
        %v750 = vpack.c.b16 %v642, %v641
        %v751 = vpack.c.b16 %v644, %v643
        %v752 = vpack.c.b16 %v646, %v645
        %v753 = vpack.c.b16 %v648, %v647
        %v754 = vpack.c.b16 %v650, %v649
        %v755 = vpack.c.b16 %v652, %v651
        %v756 = vpack.c.b16 %v654, %v653
        %v757 = vpack.c.b16 %v656, %v655
        %v758 = vpack.c.b16 %v658, %v657
        %v759 = vpack.c.b16 %v660, %v659
        %v760 = vpack.c.b16 %v662, %v661
        %v761 = vpack.c.b16 %v664, %v663
        %v762 = vpack.c.b16 %v666, %v665
        %v763 = vpack.c.b16 %v668, %v667
        %v764 = vpack.c.b16 %v670, %v669
        %v765 = vpack.c.b16 %v672, %v671
        %v766 = vpack.c.b16 %v674, %v673
        %v767 = vpack.c.b16 %v676, %v675
        %v768 = vpack.c.b16 %v678, %v677
        %v769 = vpack.c.b16 %v680, %v679
        %v770 = vpack.c.b16 %v682, %v681
        %v771 = vpack.c.b16 %v684, %v683
        %v772 = vpack.c.b16 %v686, %v685
        %v773 = vpack.c.b16 %v688, %v687
        %v774 = vpack.c.b16 %v690, %v689
        %v775 = vpack.c.b16 %v692, %v691
        %v776 = vpack.c.b16 %v694, %v693
        %v777 = vpack.c.b16 %v696, %v695
        %v778 = vpack.c.b16 %v698, %v697
        %v779 = vpack.c.b16 %v700, %v699
        %v780 = vpack.c.b16 %v702, %v701
        %v781 = vpack.c.b16 %v704, %v703
        %v782 = vpack.c.b16 %v706, %v705
        %v783 = vpack.c.b16 %v708, %v707
        %v784 = vpack.c.b16 %v710, %v709
        %v785 = vpack.c.b16 %v712, %v711
        %v786 = vpack.c.b16 %v714, %v713
        %v787 = vpack.c.b16 %v716, %v715
        %v788 = vpack.c.b16 %v718, %v717
        %v789 = vpack.c.b16 %v720, %v719
        %v790 = vpack.c.b16 %v722, %v721
        %v791 = vpack.c.b16 %v724, %v723
        %v792 = vpack.c.b16 %v726, %v725
        %v793 = vpack.c.b16 %v728, %v727
        %v794 = vpack.c.b16 %v730, %v729
        %v795 = vpack.c.b16 %v732, %v731
        %v796 = vpack.c.b16 %v734, %v733
        %v797 = vpack.c.b16 %v736, %v735
        %v798 = vpack.c.b16 %v738, %v737
        %v799 = vpack.c.b16 %v740, %v739
        %v800 = vpack.c.b16 %v742, %v741
        %v801 = vpack.c.b16 %v744, %v743
        %v802 = vpack.c.b16 %v746, %v745
        %859 = vmatprep.subr.bf16.mxu0 0
        %860 = vmatpush1.bf16.msra.mxu0 %v747
        %861 = vmatprep.subr.bf16.mxu0 0
        %862 = vmatpush1.bf16.msra.mxu0 %v748
        %863 = vmatprep.subr.bf16.mxu0 0
        %864 = vmatpush1.bf16.msra.mxu0 %v749
        %865 = vmatprep.subr.bf16.mxu0 0
        %866 = vmatpush1.bf16.msra.mxu0 %v750
        %867 = vmatprep.subr.bf16.mxu0 0
        %868 = vmatpush1.bf16.msra.mxu0 %v751
        %869 = vmatprep.subr.bf16.mxu0 0
        %870 = vmatpush1.bf16.msra.mxu0 %v752
        %871 = vmatprep.subr.bf16.mxu0 0
        %872 = vmatpush1.bf16.msra.mxu0 %v753
        %873 = vmatprep.subr.bf16.mxu0 0
        %874 = vmatpush1.bf16.msra.mxu0 %v754
        %875 = vmatprep.subr.bf16.mxu0 0
        %876 = vmatpush1.bf16.msra.mxu0 %v755
        %877 = vmatprep.subr.bf16.mxu0 0
        %878 = vmatpush1.bf16.msra.mxu0 %v756
        %879 = vmatprep.subr.bf16.mxu0 0
        %880 = vmatpush1.bf16.msra.mxu0 %v757
        %881 = vmatprep.subr.bf16.mxu0 0
        %882 = vmatpush1.bf16.msra.mxu0 %v758
        %883 = vmatprep.subr.bf16.mxu0 0
        %884 = vmatpush1.bf16.msra.mxu0 %v759
        %885 = vmatprep.subr.bf16.mxu0 0
        %886 = vmatpush1.bf16.msra.mxu0 %v760
        %887 = vmatprep.subr.bf16.mxu0 0
        %888 = vmatpush1.bf16.msra.mxu0 %v761
        %889 = vmatprep.subr.bf16.mxu0 0
        %890 = vmatpush1.bf16.msra.mxu0 %v762
        %891 = vmatprep.mubr.bf16.mxu0 %v365
        %892 = vmatmul.mubr.bf16.gmra.mrb[0].mxu0 %v351
        %v893 = vpop.f32.mrb[0].mxu0
        %v894 = vadd.f32 0.0, %v893
        %v895 = vpop.f32.mrb[0].mxu0
        %v896 = vpop.f32.mrb[0].mxu0
        %v897 = vadd.f32 0.0, %v896
        %v898 = vpop.f32.mrb[0].mxu0
        %899 = vmatprep.mubr.bf16.mxu0 %v368
        %900 = vmatmul.mubr.bf16.gmra.mrb[0].mxu0 %v352
        %v901 = vpop.f32.mrb[0].mxu0
        %v902 = vadd.f32 0.0, %v901
        %v903 = vpop.f32.mrb[0].mxu0
        %v904 = vpop.f32.mrb[0].mxu0
        %v905 = vpop.f32.mrb[0].mxu0
        %906 = vdwg.mxu0
        %907 = vmatprep.subr.bf16.mxu0 0
        %908 = vmatpush1.bf16.msra.mxu0 %v763
        %909 = vmatprep.subr.bf16.mxu0 0
        %910 = vmatpush1.bf16.msra.mxu0 %v764
        %911 = vmatprep.subr.bf16.mxu0 0
        %912 = vmatpush1.bf16.msra.mxu0 %v765
        %913 = vmatprep.subr.bf16.mxu0 0
        %914 = vmatpush1.bf16.msra.mxu0 %v766
        %915 = vmatprep.subr.bf16.mxu0 0
        %916 = vmatpush1.bf16.msra.mxu0 %v767
        %917 = vmatprep.subr.bf16.mxu0 0
        %918 = vmatpush1.bf16.msra.mxu0 %v768
        %919 = vmatprep.subr.bf16.mxu0 0
        %920 = vmatpush1.bf16.msra.mxu0 %v769
        %921 = vmatprep.subr.bf16.mxu0 0
        %922 = vmatpush1.bf16.msra.mxu0 %v770
        %923 = vmatprep.subr.bf16.mxu0 0
        %924 = vmatpush1.bf16.msra.mxu0 %v771
        %925 = vmatprep.subr.bf16.mxu0 0
        %926 = vmatpush1.bf16.msra.mxu0 %v772
        %927 = vmatprep.subr.bf16.mxu0 0
        %928 = vmatpush1.bf16.msra.mxu0 %v773
        %929 = vmatprep.subr.bf16.mxu0 0
        %930 = vmatpush1.bf16.msra.mxu0 %v774
        %931 = vmatprep.subr.bf16.mxu0 0
        %932 = vmatpush1.bf16.msra.mxu0 %v775
        %933 = vmatprep.subr.bf16.mxu0 0
        %934 = vmatpush1.bf16.msra.mxu0 %v776
        %935 = vmatprep.subr.bf16.mxu0 0
        %936 = vmatpush1.bf16.msra.mxu0 %v777
        %937 = vmatprep.subr.bf16.mxu0 0
        %938 = vmatpush1.bf16.msra.mxu0 %v778
        %939 = vmatprep.mubr.bf16.mxu0 %v386
        %940 = vmatmul.mubr.bf16.gmra.mrb[0].mxu0 %v376
        %v941 = vpop.f32.mrb[0].mxu0
        %v942 = vadd.f32 %v894, %v941
        %v943 = vpop.f32.mrb[0].mxu0
        %v944 = vpop.f32.mrb[0].mxu0
        %v945 = vadd.f32 %v897, %v944
        %v946 = vpop.f32.mrb[0].mxu0
        %947 = vmatprep.mubr.bf16.mxu0 %v385
        %948 = vmatmul.mubr.bf16.gmra.mrb[0].mxu0 %v375
        %v949 = vpop.f32.mrb[0].mxu0
        %v950 = vadd.f32 %v902, %v949
        %v951 = vpop.f32.mrb[0].mxu0
        %v952 = vpop.f32.mrb[0].mxu0
        %v953 = vpop.f32.mrb[0].mxu0
        %954 = vdwg.mxu0
        %955 = vmatprep.subr.bf16.mxu0 0
        %956 = vmatpush1.bf16.msra.mxu0 %v779
        %957 = vmatprep.subr.bf16.mxu0 0
        %958 = vmatpush1.bf16.msra.mxu0 %v780
        %959 = vmatprep.subr.bf16.mxu0 0
        %960 = vmatpush1.bf16.msra.mxu0 %v781
        %961 = vmatprep.subr.bf16.mxu0 0
        %962 = vmatpush1.bf16.msra.mxu0 %v782
        %963 = vmatprep.subr.bf16.mxu0 0
        %964 = vmatpush1.bf16.msra.mxu0 %v783
        %965 = vmatprep.subr.bf16.mxu0 0
        %966 = vmatpush1.bf16.msra.mxu0 %v784
        %967 = vmatprep.subr.bf16.mxu0 0
        %968 = vmatpush1.bf16.msra.mxu0 %v785
        %969 = vmatprep.subr.bf16.mxu0 0
        %970 = vmatpush1.bf16.msra.mxu0 %v786
        %971 = vmatprep.subr.bf16.mxu0 0
        %972 = vmatpush1.bf16.msra.mxu0 %v787
        %973 = vmatprep.subr.bf16.mxu0 0
        %974 = vmatpush1.bf16.msra.mxu0 %v788
        %975 = vmatprep.subr.bf16.mxu0 0
        %976 = vmatpush1.bf16.msra.mxu0 %v789
        %977 = vmatprep.subr.bf16.mxu0 0
        %978 = vmatpush1.bf16.msra.mxu0 %v790
        %979 = vmatprep.subr.bf16.mxu0 0
        %980 = vmatpush1.bf16.msra.mxu0 %v791
        %981 = vmatprep.subr.bf16.mxu0 0
        %982 = vmatpush1.bf16.msra.mxu0 %v792
        %983 = vmatprep.subr.bf16.mxu0 0
        %984 = vmatpush1.bf16.msra.mxu0 %v793
        %985 = vmatprep.subr.bf16.mxu0 0
        %986 = vmatpush1.bf16.msra.mxu0 %v794
        %987 = vmatprep.mubr.bf16.mxu0 %v402
        %988 = vmatmul.mubr.bf16.gmra.mrb[0].mxu0 %v392
        %v989 = vpop.f32.mrb[0].mxu0
        %v990 = vadd.f32 %v942, %v989
        %v991 = vpop.f32.mrb[0].mxu0
        %v992 = vpop.f32.mrb[0].mxu0
        %v993 = vadd.f32 %v945, %v992
        %v994 = vpop.f32.mrb[0].mxu0
        %995 = vmatprep.mubr.bf16.mxu0 %v401
        %996 = vmatmul.mubr.bf16.gmra.mrb[0].mxu0 %v391
        %v997 = vpop.f32.mrb[0].mxu0
        %v998 = vadd.f32 %v950, %v997
        %v999 = vpop.f32.mrb[0].mxu0
        %v1000 = vpop.f32.mrb[0].mxu0
        %v1001 = vpop.f32.mrb[0].mxu0
        %1002 = vdwg.mxu0
        %1003 = vmatprep.subr.bf16.mxu0 0
        %1004 = vmatpush1.bf16.msra.mxu0 %v795
        %1005 = vmatprep.subr.bf16.mxu0 0
        %1006 = vmatpush1.bf16.msra.mxu0 %v796
        %1007 = vmatprep.subr.bf16.mxu0 0
        %1008 = vmatpush1.bf16.msra.mxu0 %v797
        %1009 = vmatprep.subr.bf16.mxu0 0
        %1010 = vmatpush1.bf16.msra.mxu0 %v798
        %1011 = vmatprep.subr.bf16.mxu0 0
        %1012 = vmatpush1.bf16.msra.mxu0 %v799
        %1013 = vmatprep.subr.bf16.mxu0 0
        %1014 = vmatpush1.bf16.msra.mxu0 %v800
        %1015 = vmatprep.subr.bf16.mxu0 0
        %1016 = vmatpush1.bf16.msra.mxu0 %v801
        %1017 = vmatprep.subr.bf16.mxu0 0
        %1018 = vmatpush1.bf16.msra.mxu0 %v802
        %1019 = vmatprep.subr.bf16.mxu0 0
        %1020 = vmatpush1.bf16.msra.mxu0 0
        %1021 = vmatprep.subr.bf16.mxu0 0
        %1022 = vmatpush1.bf16.msra.mxu0 0
        %1023 = vmatprep.subr.bf16.mxu0 0
        %1024 = vmatpush1.bf16.msra.mxu0 0
        %1025 = vmatprep.subr.bf16.mxu0 0
        %1026 = vmatpush1.bf16.msra.mxu0 0
        %1027 = vmatprep.subr.bf16.mxu0 0
        %1028 = vmatpush1.bf16.msra.mxu0 0
        %1029 = vmatprep.subr.bf16.mxu0 0
        %1030 = vmatpush1.bf16.msra.mxu0 0
        %1031 = vmatprep.subr.bf16.mxu0 0
        %1032 = vmatpush1.bf16.msra.mxu0 0
        %1033 = vmatprep.subr.bf16.mxu0 0
        %1034 = vmatpush1.bf16.msra.mxu0 0
        %1035 = vmatprep.mubr.bf16.mxu0 0
        %1036 = vmatmul.mubr.bf16.gmra.mrb[0].mxu0 %v408
        %v1037 = vpop.f32.mrb[0].mxu0
        %v1038 = vadd.f32 %v990, %v1037
        %v1039 = vpop.f32.mrb[0].mxu0
        %v1040 = vpop.f32.mrb[0].mxu0
        %v1041 = vadd.f32 %v993, %v1040
        %v1042 = vpop.f32.mrb[0].mxu0
        %1043 = vmatprep.mubr.bf16.mxu0 0
        %1044 = vmatmul.mubr.bf16.gmra.mrb[0].mxu0 %v407
        %v1045 = vpop.f32.mrb[0].mxu0
        %v1046 = vadd.f32 %v998, %v1045
        %v1047 = vpop.f32.mrb[0].mxu0
        %v1048 = vpop.f32.mrb[0].mxu0
        %v1049 = vpop.f32.mrb[0].mxu0
        %1050 = vdwg.mxu0
        %v1051 = vld [vmem:[#allocation10] sm:$0x1]
        %v1052 = vlaneseq
        %v1053 = vshrl.u32 %v1052, 7
        %v1054 = vsub.s32 0, %v1053
        %v1055 = vrot.slane %v1051, %v1054
        %v1056 = vmul.f32 %v1038, %v1055
        %v1057 = vmul.f32 %v1041, %v1055
        %v1058 = vmul.f32 %v1046, %v1055
        %v1059 = vld [vmem:[#allocation10 + $0x1] sm:$0x1]
        %v1060 = vlaneseq
        %v1061 = vshrl.u32 %v1060, 7
        %v1062 = vsub.s32 0, %v1061
        %v1063 = vrot.slane %v1059, %v1062
        %v1064 = vadd.f32 %v1056, %v1063
        %v1065 = vadd.f32 %v1057, %v1063
        %v1066 = vadd.f32 %v1058, %v1063
        %v1067 = vmax.f32 %v1064, 0.0
        %v1068 = vmax.f32 %v1065, 0.0
        %v1069 = vmax.f32 %v1066, 0.0
        %v1070 = vlaneseq
        %v1071 = vshrl.u32 %v1070, 7
        %v1072 = vadd.s32 %v1071, 8
        %v1073 = vadd.s32 %v1071, 16
        %s1074 = ssub.s32 %s329, 3
        %v1075 = vstv %s1074
        %v1076 = vadd.s32 %v1075, %v1071
        %v1077 = vadd.s32 %v1075, %v1072
        %v1078 = vadd.s32 %v1075, %v1073
        %vm1079 = vcmp.ge.s32.totalorder %v1076, 0
        %vm1080 = vcmp.ge.s32.totalorder %v1077, 0
        %vm1081 = vcmp.ge.s32.totalorder %v1078, 0
        %vm1082 = vcmp.lt.s32.totalorder %v1076, 16
        %vm1083 = vcmp.lt.s32.totalorder %v1077, 16
        %vm1084 = vcmp.lt.s32.totalorder %v1078, 16
        %vm1085 = vmand %vm1079, %vm1082
        %vm1086 = vmand %vm1080, %vm1083
        %vm1087 = vmand %vm1081, %vm1084
        %v1088 = vsel %vm1085, 1, 0
        %v1089 = vsel %vm1086, 1, 0
        %v1090 = vsel %vm1087, 1, 0
        %vm1091 = vcmp.eq.s32.totalorder %v1088, 1
        %vm1092 = vcmp.eq.s32.totalorder %v1089, 1
        %vm1093 = vcmp.eq.s32.totalorder %v1090, 1
        %v1094 = vsel %vm1091, %v1067, 0.0
        %v1095 = vsel %vm1092, %v1068, 0.0
        %v1096 = vsel %vm1093, %v1069, 0.0
        %v1097 = vpack.c.bf16 %v1095, %v1094
        %v1098 = vpack.c.bf16 %v1096, %v1096
        %v1100 = vshrl.u32 %v1097, 16
        %v1102 = vshll.u32 %v1097, 16
        %v1104 = vrot.slane %v1102, 1
        %v1105 = vor.u32 %v1100, %v1104
        %v1107 = vshll.u32 %v1098, 16
        %v1109 = vrot.slane %v1107, 1
        %v1110 = vsel %vm353, %v1105, %v1109
        %v1114 = vrot.slane %v1097, 1
        %v1115 = vrot.slane %v1098, 1
        %v1116 = vsel %vm373, %v1114, %v1115
        %v1118 = vrot.slane %v1100, 1
        %v1119 = vrot.slane %v1102, 2
        %v1120 = vor.u32 %v1118, %v1119
        %v1121 = vshrl.u32 %v1098, 16
        %v1123 = vrot.slane %v1121, 1
        %v1124 = vrot.slane %v1107, 2
        %v1125 = vor.u32 %v1123, %v1124
        %v1126 = vsel %vm379, %v1120, %v1125
        %v1128 = vrot.slane %v1097, 2
        %v1129 = vrot.slane %v1098, 2
        %v1130 = vsel %vm389, %v1128, %v1129
        %v1132 = vrot.slane %v1100, 2
        %v1133 = vrot.slane %v1102, 3
        %v1134 = vor.u32 %v1132, %v1133
        %v1135 = vrot.slane %v1121, 2
        %v1136 = vrot.slane %v1107, 3
        %v1137 = vor.u32 %v1135, %v1136
        %v1138 = vsel %vm395, %v1134, %v1137
        %v1140 = vrot.slane %v1097, 3
        %v1141 = vrot.slane %v1098, 3
        %v1142 = vsel %vm405, %v1140, %v1141
        %v1144 = vld [vmem:[#allocation7] sm:$0xf]
        %v1145 = vld [vmem:[#allocation7 + $0x4] sm:$0xf]
        %v1146 = vld [vmem:[#allocation7 + $0x8] sm:$0xf]
        %v1147 = vld [vmem:[#allocation7 + $0xc] sm:$0xf]
        %v1148 = vld [vmem:[#allocation7 + $0x10] sm:$0xf]
        %v1149 = vld [vmem:[#allocation7 + $0x14] sm:$0xf]
        %v1150 = vld [vmem:[#allocation7 + $0x18] sm:$0xf]
        %v1151 = vld [vmem:[#allocation7 + $0x1c] sm:$0xf]
        %v1152 = vld [vmem:[#allocation7 + $0x20] sm:$0xf]
        %v1153 = vld [vmem:[#allocation7 + $0x24] sm:$0xf]
        %v1154 = vld [vmem:[#allocation7 + $0x28] sm:$0xf]
        %v1155 = vld [vmem:[#allocation7 + $0x2c] sm:$0xf]
        %v1156 = vld [vmem:[#allocation7 + $0x30] sm:$0xf]
        %v1157 = vld [vmem:[#allocation7 + $0x34] sm:$0xf]
        %v1158 = vld [vmem:[#allocation7 + $0x38] sm:$0xf]
        %v1159 = vld [vmem:[#allocation7 + $0x3c] sm:$0xf]
        %v1160 = vld [vmem:[#allocation7 + $0x40] sm:$0xf]
        %v1161 = vld [vmem:[#allocation7 + $0x44] sm:$0xf]
        %v1162 = vld [vmem:[#allocation7 + $0x48] sm:$0xf]
        %v1163 = vld [vmem:[#allocation7 + $0x4c] sm:$0xf]
        %v1164 = vld [vmem:[#allocation7 + $0x50] sm:$0xf]
        %v1165 = vld [vmem:[#allocation7 + $0x54] sm:$0xf]
        %v1166 = vld [vmem:[#allocation7 + $0x58] sm:$0xf]
        %v1167 = vld [vmem:[#allocation7 + $0x5c] sm:$0xf]
        %v1168 = vld [vmem:[#allocation7 + $0x60] sm:$0xf]
        %v1169 = vld [vmem:[#allocation7 + $0x64] sm:$0xf]
        %v1170 = vld [vmem:[#allocation7 + $0x68] sm:$0xf]
        %v1171 = vld [vmem:[#allocation7 + $0x6c] sm:$0xf]
        %v1172 = vld [vmem:[#allocation7 + $0x70] sm:$0xf]
        %v1173 = vld [vmem:[#allocation7 + $0x74] sm:$0xf]
        %v1174 = vld [vmem:[#allocation7 + $0x78] sm:$0xf]
        %v1175 = vld [vmem:[#allocation7 + $0x7c] sm:$0xf]
        %v1176 = vld [vmem:[#allocation7 + $0x80] sm:$0xf]
        %v1177 = vld [vmem:[#allocation7 + $0x84] sm:$0xf]
        %v1178 = vld [vmem:[#allocation7 + $0x88] sm:$0xf]
        %v1179 = vld [vmem:[#allocation7 + $0x8c] sm:$0xf]
        %v1180 = vld [vmem:[#allocation7 + $0x90] sm:$0xf]
        %v1181 = vld [vmem:[#allocation7 + $0x94] sm:$0xf]
        %v1182 = vld [vmem:[#allocation7 + $0x98] sm:$0xf]
        %v1183 = vld [vmem:[#allocation7 + $0x9c] sm:$0xf]
        %v1184 = vld [vmem:[#allocation7 + $0xa0] sm:$0xf]
        %v1185 = vld [vmem:[#allocation7 + $0xa4] sm:$0xf]
        %v1186 = vld [vmem:[#allocation7 + $0xa8] sm:$0xf]
        %v1187 = vld [vmem:[#allocation7 + $0xac] sm:$0xf]
        %v1188 = vld [vmem:[#allocation7 + $0xb0] sm:$0xf]
        %v1189 = vld [vmem:[#allocation7 + $0xb4] sm:$0xf]
        %v1190 = vld [vmem:[#allocation7 + $0xb8] sm:$0xf]
        %v1191 = vld [vmem:[#allocation7 + $0xbc] sm:$0xf]
        %v1192 = vld [vmem:[#allocation7 + $0xc0] sm:$0xf]
        %v1193 = vld [vmem:[#allocation7 + $0xc4] sm:$0xf]
        %v1194 = vld [vmem:[#allocation7 + $0xc8] sm:$0xf]
        %v1195 = vld [vmem:[#allocation7 + $0xcc] sm:$0xf]
        %v1196 = vld [vmem:[#allocation7 + $0xd0] sm:$0xf]
        %v1197 = vld [vmem:[#allocation7 + $0xd4] sm:$0xf]
        %v1198 = vld [vmem:[#allocation7 + $0xd8] sm:$0xf]
        %v1199 = vld [vmem:[#allocation7 + $0xdc] sm:$0xf]
        %v1200 = vld [vmem:[#allocation7 + $0xe0] sm:$0xf]
        %v1201 = vld [vmem:[#allocation7 + $0xe4] sm:$0xf]
        %v1202 = vld [vmem:[#allocation7 + $0xe8] sm:$0xf]
        %v1203 = vld [vmem:[#allocation7 + $0xec] sm:$0xf]
        %v1204 = vld [vmem:[#allocation7 + $0xf0] sm:$0xf]
        %v1205 = vld [vmem:[#allocation7 + $0xf4] sm:$0xf]
        %v1206 = vld [vmem:[#allocation7 + $0xf8] sm:$0xf]
        %v1207 = vld [vmem:[#allocation7 + $0xfc] sm:$0xf]
        %v1208 = vld [vmem:[#allocation7 + $0x100] sm:$0xf]
        %v1209 = vld [vmem:[#allocation7 + $0x104] sm:$0xf]
        %v1210 = vld [vmem:[#allocation7 + $0x108] sm:$0xf]
        %v1211 = vld [vmem:[#allocation7 + $0x10c] sm:$0xf]
        %v1212 = vld [vmem:[#allocation7 + $0x110] sm:$0xf]
        %v1213 = vld [vmem:[#allocation7 + $0x114] sm:$0xf]
        %v1214 = vld [vmem:[#allocation7 + $0x118] sm:$0xf]
        %v1215 = vld [vmem:[#allocation7 + $0x11c] sm:$0xf]
        %v1216 = vld [vmem:[#allocation7 + $0x120] sm:$0xf]
        %v1217 = vld [vmem:[#allocation7 + $0x124] sm:$0xf]
        %v1218 = vld [vmem:[#allocation7 + $0x128] sm:$0xf]
        %v1219 = vld [vmem:[#allocation7 + $0x12c] sm:$0xf]
        %v1220 = vld [vmem:[#allocation7 + $0x130] sm:$0xf]
        %v1221 = vld [vmem:[#allocation7 + $0x134] sm:$0xf]
        %v1222 = vld [vmem:[#allocation7 + $0x138] sm:$0xf]
        %v1223 = vld [vmem:[#allocation7 + $0x13c] sm:$0xf]
        %v1224 = vld [vmem:[#allocation7 + $0x140] sm:$0xf]
        %v1225 = vld [vmem:[#allocation7 + $0x144] sm:$0xf]
        %v1226 = vld [vmem:[#allocation7 + $0x148] sm:$0xf]
        %v1227 = vld [vmem:[#allocation7 + $0x14c] sm:$0xf]
        %v1228 = vld [vmem:[#allocation7 + $0x150] sm:$0xf]
        %v1229 = vld [vmem:[#allocation7 + $0x154] sm:$0xf]
        %v1230 = vld [vmem:[#allocation7 + $0x158] sm:$0xf]
        %v1231 = vld [vmem:[#allocation7 + $0x15c] sm:$0xf]
        %v1232 = vld [vmem:[#allocation7 + $0x160] sm:$0xf]
        %v1233 = vld [vmem:[#allocation7 + $0x164] sm:$0xf]
        %v1234 = vld [vmem:[#allocation7 + $0x168] sm:$0xf]
        %v1235 = vld [vmem:[#allocation7 + $0x16c] sm:$0xf]
        %v1236 = vld [vmem:[#allocation7 + $0x170] sm:$0xf]
        %v1237 = vld [vmem:[#allocation7 + $0x174] sm:$0xf]
        %v1238 = vld [vmem:[#allocation7 + $0x178] sm:$0xf]
        %v1239 = vld [vmem:[#allocation7 + $0x17c] sm:$0xf]
        %v1240 = vld [vmem:[#allocation7 + $0x180] sm:$0xf]
        %v1241 = vld [vmem:[#allocation7 + $0x184] sm:$0xf]
        %v1242 = vld [vmem:[#allocation7 + $0x188] sm:$0xf]
        %v1243 = vld [vmem:[#allocation7 + $0x18c] sm:$0xf]
        %v1244 = vld [vmem:[#allocation7 + $0x190] sm:$0xf]
        %v1245 = vld [vmem:[#allocation7 + $0x194] sm:$0xf]
        %v1246 = vld [vmem:[#allocation7 + $0x198] sm:$0xf]
        %v1247 = vld [vmem:[#allocation7 + $0x19c] sm:$0xf]
        %v1248 = vld [vmem:[#allocation7 + $0x1a0] sm:$0xf]
        %v1249 = vld [vmem:[#allocation7 + $0x1a4] sm:$0xf]
        %v1250 = vld [vmem:[#allocation7 + $0x1a8] sm:$0xf]
        %v1251 = vld [vmem:[#allocation7 + $0x1ac] sm:$0xf]
        %v1252 = vld [vmem:[#allocation7 + $0x1b0] sm:$0xf]
        %v1253 = vld [vmem:[#allocation7 + $0x1b4] sm:$0xf]
        %v1254 = vld [vmem:[#allocation7 + $0x1b8] sm:$0xf]
        %v1255 = vld [vmem:[#allocation7 + $0x1bc] sm:$0xf]
        %v1368 = vunpack.c.l.b16 %v1144
        %v1369 = vunpack.c.l.b16 %v1145
        %v1370 = vunpack.c.l.b16 %v1146
        %v1371 = vunpack.c.l.b16 %v1147
        %v1372 = vunpack.c.l.b16 %v1148
        %v1373 = vunpack.c.l.b16 %v1149
        %v1374 = vunpack.c.l.b16 %v1150
        %v1375 = vunpack.c.l.b16 %v1151
        %v1376 = vunpack.c.l.b16 %v1152
        %v1377 = vunpack.c.l.b16 %v1153
        %v1378 = vunpack.c.l.b16 %v1154
        %v1379 = vunpack.c.l.b16 %v1155
        %v1380 = vunpack.c.l.b16 %v1156
        %v1381 = vunpack.c.l.b16 %v1157
        %v1382 = vunpack.c.l.b16 %v1158
        %v1383 = vunpack.c.l.b16 %v1159
        %v1384 = vunpack.c.l.b16 %v1160
        %v1385 = vunpack.c.l.b16 %v1161
        %v1386 = vunpack.c.l.b16 %v1162
        %v1387 = vunpack.c.l.b16 %v1163
        %v1388 = vunpack.c.l.b16 %v1164
        %v1389 = vunpack.c.l.b16 %v1165
        %v1390 = vunpack.c.l.b16 %v1166
        %v1391 = vunpack.c.l.b16 %v1167
        %v1392 = vunpack.c.l.b16 %v1168
        %v1393 = vunpack.c.l.b16 %v1169
        %v1394 = vunpack.c.l.b16 %v1170
        %v1395 = vunpack.c.l.b16 %v1171
        %v1396 = vunpack.c.l.b16 %v1172
        %v1397 = vunpack.c.l.b16 %v1173
        %v1398 = vunpack.c.l.b16 %v1174
        %v1399 = vunpack.c.l.b16 %v1175
        %v1400 = vunpack.c.l.b16 %v1176
        %v1401 = vunpack.c.l.b16 %v1177
        %v1402 = vunpack.c.l.b16 %v1178
        %v1403 = vunpack.c.l.b16 %v1179
        %v1404 = vunpack.c.l.b16 %v1180
        %v1405 = vunpack.c.l.b16 %v1181
        %v1406 = vunpack.c.l.b16 %v1182
        %v1407 = vunpack.c.l.b16 %v1183
        %v1408 = vunpack.c.l.b16 %v1184
        %v1409 = vunpack.c.l.b16 %v1185
        %v1410 = vunpack.c.l.b16 %v1186
        %v1411 = vunpack.c.l.b16 %v1187
        %v1412 = vunpack.c.l.b16 %v1188
        %v1413 = vunpack.c.l.b16 %v1189
        %v1414 = vunpack.c.l.b16 %v1190
        %v1415 = vunpack.c.l.b16 %v1191
        %v1416 = vunpack.c.l.b16 %v1192
        %v1417 = vunpack.c.l.b16 %v1193
        %v1418 = vunpack.c.l.b16 %v1194
        %v1419 = vunpack.c.l.b16 %v1195
        %v1420 = vunpack.c.l.b16 %v1196
        %v1421 = vunpack.c.l.b16 %v1197
        %v1422 = vunpack.c.l.b16 %v1198
        %v1423 = vunpack.c.l.b16 %v1199
        %v1424 = vunpack.c.l.b16 %v1200
        %v1425 = vunpack.c.l.b16 %v1201
        %v1426 = vunpack.c.l.b16 %v1202
        %v1427 = vunpack.c.l.b16 %v1203
        %v1428 = vunpack.c.l.b16 %v1204
        %v1429 = vunpack.c.l.b16 %v1205
        %v1430 = vunpack.c.l.b16 %v1206
        %v1431 = vunpack.c.l.b16 %v1207
        %v1432 = vunpack.c.l.b16 %v1208
        %v1433 = vunpack.c.l.b16 %v1209
        %v1434 = vunpack.c.l.b16 %v1210
        %v1435 = vunpack.c.l.b16 %v1211
        %v1436 = vunpack.c.l.b16 %v1212
        %v1437 = vunpack.c.l.b16 %v1213
        %v1438 = vunpack.c.l.b16 %v1214
        %v1439 = vunpack.c.l.b16 %v1215
        %v1440 = vunpack.c.l.b16 %v1216
        %v1441 = vunpack.c.l.b16 %v1217
        %v1442 = vunpack.c.l.b16 %v1218
        %v1443 = vunpack.c.l.b16 %v1219
        %v1444 = vunpack.c.l.b16 %v1220
        %v1445 = vunpack.c.l.b16 %v1221
        %v1446 = vunpack.c.l.b16 %v1222
        %v1447 = vunpack.c.l.b16 %v1223
        %v1448 = vunpack.c.l.b16 %v1224
        %v1449 = vunpack.c.l.b16 %v1225
        %v1450 = vunpack.c.l.b16 %v1226
        %v1451 = vunpack.c.l.b16 %v1227
        %v1452 = vunpack.c.l.b16 %v1228
        %v1453 = vunpack.c.l.b16 %v1229
        %v1454 = vunpack.c.l.b16 %v1230
        %v1455 = vunpack.c.l.b16 %v1231
        %v1456 = vunpack.c.l.b16 %v1232
        %v1457 = vunpack.c.l.b16 %v1233
        %v1458 = vunpack.c.l.b16 %v1234
        %v1459 = vunpack.c.l.b16 %v1235
        %v1460 = vunpack.c.l.b16 %v1236
        %v1461 = vunpack.c.l.b16 %v1237
        %v1462 = vunpack.c.l.b16 %v1238
        %v1463 = vunpack.c.l.b16 %v1239
        %v1464 = vunpack.c.l.b16 %v1240
        %v1465 = vunpack.c.l.b16 %v1241
        %v1466 = vunpack.c.l.b16 %v1242
        %v1467 = vunpack.c.l.b16 %v1243
        %v1468 = vunpack.c.l.b16 %v1244
        %v1469 = vunpack.c.l.b16 %v1245
        %v1470 = vunpack.c.l.b16 %v1246
        %v1471 = vunpack.c.l.b16 %v1247
        %v1472 = vunpack.c.l.b16 %v1248
        %v1473 = vunpack.c.l.b16 %v1249
        %v1474 = vunpack.c.l.b16 %v1250
        %v1475 = vunpack.c.l.b16 %v1251
        %v1476 = vunpack.c.l.b16 %v1252
        %v1477 = vunpack.c.l.b16 %v1253
        %v1478 = vunpack.c.l.b16 %v1254
        %v1479 = vunpack.c.l.b16 %v1255
        %v1480 = vpack.c.b16 %v1369, %v1368
        %v1481 = vpack.c.b16 %v1371, %v1370
        %v1482 = vpack.c.b16 %v1373, %v1372
        %v1483 = vpack.c.b16 %v1375, %v1374
        %v1484 = vpack.c.b16 %v1377, %v1376
        %v1485 = vpack.c.b16 %v1379, %v1378
        %v1486 = vpack.c.b16 %v1381, %v1380
        %v1487 = vpack.c.b16 %v1383, %v1382
        %v1488 = vpack.c.b16 %v1385, %v1384
        %v1489 = vpack.c.b16 %v1387, %v1386
        %v1490 = vpack.c.b16 %v1389, %v1388
        %v1491 = vpack.c.b16 %v1391, %v1390
        %v1492 = vpack.c.b16 %v1393, %v1392
        %v1493 = vpack.c.b16 %v1395, %v1394
        %v1494 = vpack.c.b16 %v1397, %v1396
        %v1495 = vpack.c.b16 %v1399, %v1398
        %v1496 = vpack.c.b16 %v1401, %v1400
        %v1497 = vpack.c.b16 %v1403, %v1402
        %v1498 = vpack.c.b16 %v1405, %v1404
        %v1499 = vpack.c.b16 %v1407, %v1406
        %v1500 = vpack.c.b16 %v1409, %v1408
        %v1501 = vpack.c.b16 %v1411, %v1410
        %v1502 = vpack.c.b16 %v1413, %v1412
        %v1503 = vpack.c.b16 %v1415, %v1414
        %v1504 = vpack.c.b16 %v1417, %v1416
        %v1505 = vpack.c.b16 %v1419, %v1418
        %v1506 = vpack.c.b16 %v1421, %v1420
        %v1507 = vpack.c.b16 %v1423, %v1422
        %v1508 = vpack.c.b16 %v1425, %v1424
        %v1509 = vpack.c.b16 %v1427, %v1426
        %v1510 = vpack.c.b16 %v1429, %v1428
        %v1511 = vpack.c.b16 %v1431, %v1430
        %v1512 = vpack.c.b16 %v1433, %v1432
        %v1513 = vpack.c.b16 %v1435, %v1434
        %v1514 = vpack.c.b16 %v1437, %v1436
        %v1515 = vpack.c.b16 %v1439, %v1438
        %v1516 = vpack.c.b16 %v1441, %v1440
        %v1517 = vpack.c.b16 %v1443, %v1442
        %v1518 = vpack.c.b16 %v1445, %v1444
        %v1519 = vpack.c.b16 %v1447, %v1446
        %v1520 = vpack.c.b16 %v1449, %v1448
        %v1521 = vpack.c.b16 %v1451, %v1450
        %v1522 = vpack.c.b16 %v1453, %v1452
        %v1523 = vpack.c.b16 %v1455, %v1454
        %v1524 = vpack.c.b16 %v1457, %v1456
        %v1525 = vpack.c.b16 %v1459, %v1458
        %v1526 = vpack.c.b16 %v1461, %v1460
        %v1527 = vpack.c.b16 %v1463, %v1462
        %v1528 = vpack.c.b16 %v1465, %v1464
        %v1529 = vpack.c.b16 %v1467, %v1466
        %v1530 = vpack.c.b16 %v1469, %v1468
        %v1531 = vpack.c.b16 %v1471, %v1470
        %v1532 = vpack.c.b16 %v1473, %v1472
        %v1533 = vpack.c.b16 %v1475, %v1474
        %v1534 = vpack.c.b16 %v1477, %v1476
        %v1535 = vpack.c.b16 %v1479, %v1478
        %1592 = vmatprep.subr.bf16.mxu0 0
        %1593 = vmatpush1.bf16.msra.mxu0 %v1480
        %1594 = vmatprep.subr.bf16.mxu0 0
        %1595 = vmatpush1.bf16.msra.mxu0 %v1481
        %1596 = vmatprep.subr.bf16.mxu0 0
        %1597 = vmatpush1.bf16.msra.mxu0 %v1482
        %1598 = vmatprep.subr.bf16.mxu0 0
        %1599 = vmatpush1.bf16.msra.mxu0 %v1483
        %1600 = vmatprep.subr.bf16.mxu0 0
        %1601 = vmatpush1.bf16.msra.mxu0 %v1484
        %1602 = vmatprep.subr.bf16.mxu0 0
        %1603 = vmatpush1.bf16.msra.mxu0 %v1485
        %1604 = vmatprep.subr.bf16.mxu0 0
        %1605 = vmatpush1.bf16.msra.mxu0 %v1486
        %1606 = vmatprep.subr.bf16.mxu0 0
        %1607 = vmatpush1.bf16.msra.mxu0 %v1487
        %1608 = vmatprep.subr.bf16.mxu0 0
        %1609 = vmatpush1.bf16.msra.mxu0 %v1488
        %1610 = vmatprep.subr.bf16.mxu0 0
        %1611 = vmatpush1.bf16.msra.mxu0 %v1489
        %1612 = vmatprep.subr.bf16.mxu0 0
        %1613 = vmatpush1.bf16.msra.mxu0 %v1490
        %1614 = vmatprep.subr.bf16.mxu0 0
        %1615 = vmatpush1.bf16.msra.mxu0 %v1491
        %1616 = vmatprep.subr.bf16.mxu0 0
        %1617 = vmatpush1.bf16.msra.mxu0 %v1492
        %1618 = vmatprep.subr.bf16.mxu0 0
        %1619 = vmatpush1.bf16.msra.mxu0 %v1493
        %1620 = vmatprep.subr.bf16.mxu0 0
        %1621 = vmatpush1.bf16.msra.mxu0 %v1494
        %1622 = vmatprep.subr.bf16.mxu0 0
        %1623 = vmatpush1.bf16.msra.mxu0 %v1495
        %1624 = vmatprep.mubr.bf16.mxu0 %v1110
        %1625 = vmatmul.mubr.bf16.gmra.mrb[0].mxu0 %v1097
        %v1626 = vpop.f32.mrb[0].mxu0
        %v1627 = vadd.f32 0.0, %v1626
        %v1628 = vpop.f32.mrb[0].mxu0
        %v1629 = vpop.f32.mrb[0].mxu0
        %v1630 = vadd.f32 0.0, %v1629
        %v1631 = vpop.f32.mrb[0].mxu0
        %1632 = vdwg.mxu0
        %1633 = vmatprep.subr.bf16.mxu0 0
        %1634 = vmatpush1.bf16.msra.mxu0 %v1496
        %1635 = vmatprep.subr.bf16.mxu0 0
        %1636 = vmatpush1.bf16.msra.mxu0 %v1497
        %1637 = vmatprep.subr.bf16.mxu0 0
        %1638 = vmatpush1.bf16.msra.mxu0 %v1498
        %1639 = vmatprep.subr.bf16.mxu0 0
        %1640 = vmatpush1.bf16.msra.mxu0 %v1499
        %1641 = vmatprep.subr.bf16.mxu0 0
        %1642 = vmatpush1.bf16.msra.mxu0 %v1500
        %1643 = vmatprep.subr.bf16.mxu0 0
        %1644 = vmatpush1.bf16.msra.mxu0 %v1501
        %1645 = vmatprep.subr.bf16.mxu0 0
        %1646 = vmatpush1.bf16.msra.mxu0 %v1502
        %1647 = vmatprep.subr.bf16.mxu0 0
        %1648 = vmatpush1.bf16.msra.mxu0 %v1503
        %1649 = vmatprep.subr.bf16.mxu0 0
        %1650 = vmatpush1.bf16.msra.mxu0 %v1504
        %1651 = vmatprep.subr.bf16.mxu0 0
        %1652 = vmatpush1.bf16.msra.mxu0 %v1505
        %1653 = vmatprep.subr.bf16.mxu0 0
        %1654 = vmatpush1.bf16.msra.mxu0 %v1506
        %1655 = vmatprep.subr.bf16.mxu0 0
        %1656 = vmatpush1.bf16.msra.mxu0 %v1507
        %1657 = vmatprep.subr.bf16.mxu0 0
        %1658 = vmatpush1.bf16.msra.mxu0 %v1508
        %1659 = vmatprep.subr.bf16.mxu0 0
        %1660 = vmatpush1.bf16.msra.mxu0 %v1509
        %1661 = vmatprep.subr.bf16.mxu0 0
        %1662 = vmatpush1.bf16.msra.mxu0 %v1510
        %1663 = vmatprep.subr.bf16.mxu0 0
        %1664 = vmatpush1.bf16.msra.mxu0 %v1511
        %1665 = vmatprep.mubr.bf16.mxu0 %v1126
        %1666 = vmatmul.mubr.bf16.gmra.mrb[0].mxu0 %v1116
        %v1667 = vpop.f32.mrb[0].mxu0
        %v1668 = vadd.f32 %v1627, %v1667
        %v1669 = vpop.f32.mrb[0].mxu0
        %v1670 = vpop.f32.mrb[0].mxu0
        %v1671 = vadd.f32 %v1630, %v1670
        %v1672 = vpop.f32.mrb[0].mxu0
        %1673 = vdwg.mxu0
        %1674 = vmatprep.subr.bf16.mxu0 0
        %1675 = vmatpush1.bf16.msra.mxu0 %v1512
        %1676 = vmatprep.subr.bf16.mxu0 0
        %1677 = vmatpush1.bf16.msra.mxu0 %v1513
        %1678 = vmatprep.subr.bf16.mxu0 0
        %1679 = vmatpush1.bf16.msra.mxu0 %v1514
        %1680 = vmatprep.subr.bf16.mxu0 0
        %1681 = vmatpush1.bf16.msra.mxu0 %v1515
        %1682 = vmatprep.subr.bf16.mxu0 0
        %1683 = vmatpush1.bf16.msra.mxu0 %v1516
        %1684 = vmatprep.subr.bf16.mxu0 0
        %1685 = vmatpush1.bf16.msra.mxu0 %v1517
        %1686 = vmatprep.subr.bf16.mxu0 0
        %1687 = vmatpush1.bf16.msra.mxu0 %v1518
        %1688 = vmatprep.subr.bf16.mxu0 0
        %1689 = vmatpush1.bf16.msra.mxu0 %v1519
        %1690 = vmatprep.subr.bf16.mxu0 0
        %1691 = vmatpush1.bf16.msra.mxu0 %v1520
        %1692 = vmatprep.subr.bf16.mxu0 0
        %1693 = vmatpush1.bf16.msra.mxu0 %v1521
        %1694 = vmatprep.subr.bf16.mxu0 0
        %1695 = vmatpush1.bf16.msra.mxu0 %v1522
        %1696 = vmatprep.subr.bf16.mxu0 0
        %1697 = vmatpush1.bf16.msra.mxu0 %v1523
        %1698 = vmatprep.subr.bf16.mxu0 0
        %1699 = vmatpush1.bf16.msra.mxu0 %v1524
        %1700 = vmatprep.subr.bf16.mxu0 0
        %1701 = vmatpush1.bf16.msra.mxu0 %v1525
        %1702 = vmatprep.subr.bf16.mxu0 0
        %1703 = vmatpush1.bf16.msra.mxu0 %v1526
        %1704 = vmatprep.subr.bf16.mxu0 0
        %1705 = vmatpush1.bf16.msra.mxu0 %v1527
        %1706 = vmatprep.mubr.bf16.mxu0 %v1138
        %1707 = vmatmul.mubr.bf16.gmra.mrb[0].mxu0 %v1130
        %v1708 = vpop.f32.mrb[0].mxu0
        %v1709 = vadd.f32 %v1668, %v1708
        %v1710 = vpop.f32.mrb[0].mxu0
        %v1711 = vpop.f32.mrb[0].mxu0
        %v1712 = vadd.f32 %v1671, %v1711
        %v1713 = vpop.f32.mrb[0].mxu0
        %1714 = vdwg.mxu0
        %1715 = vmatprep.subr.bf16.mxu0 0
        %1716 = vmatpush1.bf16.msra.mxu0 %v1528
        %1717 = vmatprep.subr.bf16.mxu0 0
        %1718 = vmatpush1.bf16.msra.mxu0 %v1529
        %1719 = vmatprep.subr.bf16.mxu0 0
        %1720 = vmatpush1.bf16.msra.mxu0 %v1530
        %1721 = vmatprep.subr.bf16.mxu0 0
        %1722 = vmatpush1.bf16.msra.mxu0 %v1531
        %1723 = vmatprep.subr.bf16.mxu0 0
        %1724 = vmatpush1.bf16.msra.mxu0 %v1532
        %1725 = vmatprep.subr.bf16.mxu0 0
        %1726 = vmatpush1.bf16.msra.mxu0 %v1533
        %1727 = vmatprep.subr.bf16.mxu0 0
        %1728 = vmatpush1.bf16.msra.mxu0 %v1534
        %1729 = vmatprep.subr.bf16.mxu0 0
        %1730 = vmatpush1.bf16.msra.mxu0 %v1535
        %1731 = vmatprep.subr.bf16.mxu0 0
        %1732 = vmatpush1.bf16.msra.mxu0 0
        %1733 = vmatprep.subr.bf16.mxu0 0
        %1734 = vmatpush1.bf16.msra.mxu0 0
        %1735 = vmatprep.subr.bf16.mxu0 0
        %1736 = vmatpush1.bf16.msra.mxu0 0
        %1737 = vmatprep.subr.bf16.mxu0 0
        %1738 = vmatpush1.bf16.msra.mxu0 0
        %1739 = vmatprep.subr.bf16.mxu0 0
        %1740 = vmatpush1.bf16.msra.mxu0 0
        %1741 = vmatprep.subr.bf16.mxu0 0
        %1742 = vmatpush1.bf16.msra.mxu0 0
        %1743 = vmatprep.subr.bf16.mxu0 0
        %1744 = vmatpush1.bf16.msra.mxu0 0
        %1745 = vmatprep.subr.bf16.mxu0 0
        %1746 = vmatpush1.bf16.msra.mxu0 0
        %1747 = vmatprep.mubr.bf16.mxu0 0
        %1748 = vmatmul.mubr.bf16.gmra.mrb[0].mxu0 %v1142
        %v1749 = vpop.f32.mrb[0].mxu0
        %v1750 = vadd.f32 %v1709, %v1749
        %v1751 = vpop.f32.mrb[0].mxu0
        %v1752 = vpop.f32.mrb[0].mxu0
        %v1753 = vadd.f32 %v1712, %v1752
        %v1754 = vpop.f32.mrb[0].mxu0
        %1755 = vdwg.mxu0
        %v1756 = vld [vmem:[#allocation12] sm:$0x1]
        %v1757 = vlaneseq
        %v1758 = vshrl.u32 %v1757, 7
        %v1759 = vsub.s32 0, %v1758
        %v1760 = vrot.slane %v1756, %v1759
        %v1761 = vmul.f32 %v1750, %v1760
        %v1762 = vmul.f32 %v1753, %v1760
        %v1763 = vld [vmem:[#allocation12 + $0x1] sm:$0x1]
        %v1764 = vlaneseq
        %v1765 = vshrl.u32 %v1764, 7
        %v1766 = vsub.s32 0, %v1765
        %v1767 = vrot.slane %v1763, %v1766
        %v1768 = vadd.f32 %v1761, %v1767
        %v1769 = vadd.f32 %v1762, %v1767
        %v1770 = vld [vmem:[#allocation9] sm:$0xf]
        %v1771 = vld [vmem:[#allocation9 + $0x4] sm:$0xf]
        %v1772 = vld [vmem:[#allocation9 + $0x8] sm:$0xf]
        %v1773 = vld [vmem:[#allocation9 + $0xc] sm:$0xf]
        %v1774 = vld [vmem:[#allocation9 + $0x10] sm:$0xf]
        %v1775 = vld [vmem:[#allocation9 + $0x14] sm:$0xf]
        %v1776 = vld [vmem:[#allocation9 + $0x18] sm:$0xf]
        %v1777 = vld [vmem:[#allocation9 + $0x1c] sm:$0xf]
        %v1778 = vld [vmem:[#allocation9 + $0x20] sm:$0xf]
        %v1779 = vld [vmem:[#allocation9 + $0x24] sm:$0xf]
        %v1780 = vld [vmem:[#allocation9 + $0x28] sm:$0xf]
        %v1781 = vld [vmem:[#allocation9 + $0x2c] sm:$0xf]
        %v1782 = vld [vmem:[#allocation9 + $0x30] sm:$0xf]
        %v1783 = vld [vmem:[#allocation9 + $0x34] sm:$0xf]
        %v1784 = vld [vmem:[#allocation9 + $0x38] sm:$0xf]
        %v1785 = vld [vmem:[#allocation9 + $0x3c] sm:$0xf]
        %v1802 = vunpack.c.l.b16 %v1770
        %v1803 = vunpack.c.l.b16 %v1771
        %v1804 = vunpack.c.l.b16 %v1772
        %v1805 = vunpack.c.l.b16 %v1773
        %v1806 = vunpack.c.l.b16 %v1774
        %v1807 = vunpack.c.l.b16 %v1775
        %v1808 = vunpack.c.l.b16 %v1776
        %v1809 = vunpack.c.l.b16 %v1777
        %v1810 = vunpack.c.l.b16 %v1778
        %v1811 = vunpack.c.l.b16 %v1779
        %v1812 = vunpack.c.l.b16 %v1780
        %v1813 = vunpack.c.l.b16 %v1781
        %v1814 = vunpack.c.l.b16 %v1782
        %v1815 = vunpack.c.l.b16 %v1783
        %v1816 = vunpack.c.l.b16 %v1784
        %v1817 = vunpack.c.l.b16 %v1785
        %v1818 = vpack.c.b16 %v1803, %v1802
        %v1819 = vpack.c.b16 %v1805, %v1804
        %v1820 = vpack.c.b16 %v1807, %v1806
        %v1821 = vpack.c.b16 %v1809, %v1808
        %v1822 = vpack.c.b16 %v1811, %v1810
        %v1823 = vpack.c.b16 %v1813, %v1812
        %v1824 = vpack.c.b16 %v1815, %v1814
        %v1825 = vpack.c.b16 %v1817, %v1816
        %1834 = vmatprep.subr.bf16.mxu0 0
        %1835 = vmatpush1.bf16.msra.mxu0 %v1818
        %1836 = vmatprep.subr.bf16.mxu0 0
        %1837 = vmatpush1.bf16.msra.mxu0 %v1819
        %1838 = vmatprep.subr.bf16.mxu0 0
        %1839 = vmatpush1.bf16.msra.mxu0 %v1820
        %1840 = vmatprep.subr.bf16.mxu0 0
        %1841 = vmatpush1.bf16.msra.mxu0 %v1821
        %1842 = vmatprep.subr.bf16.mxu0 0
        %1843 = vmatpush1.bf16.msra.mxu0 %v1822
        %1844 = vmatprep.subr.bf16.mxu0 0
        %1845 = vmatpush1.bf16.msra.mxu0 %v1823
        %1846 = vmatprep.subr.bf16.mxu0 0
        %1847 = vmatpush1.bf16.msra.mxu0 %v1824
        %1848 = vmatprep.subr.bf16.mxu0 0
        %1849 = vmatpush1.bf16.msra.mxu0 %v1825
        %1850 = vmatprep.subr.bf16.mxu0 0
        %1851 = vmatpush1.bf16.msra.mxu0 0
        %1852 = vmatprep.subr.bf16.mxu0 0
        %1853 = vmatpush1.bf16.msra.mxu0 0
        %1854 = vmatprep.subr.bf16.mxu0 0
        %1855 = vmatpush1.bf16.msra.mxu0 0
        %1856 = vmatprep.subr.bf16.mxu0 0
        %1857 = vmatpush1.bf16.msra.mxu0 0
        %1858 = vmatprep.subr.bf16.mxu0 0
        %1859 = vmatpush1.bf16.msra.mxu0 0
        %1860 = vmatprep.subr.bf16.mxu0 0
        %1861 = vmatpush1.bf16.msra.mxu0 0
        %1862 = vmatprep.subr.bf16.mxu0 0
        %1863 = vmatpush1.bf16.msra.mxu0 0
        %1864 = vmatprep.subr.bf16.mxu0 0
        %1865 = vmatpush1.bf16.msra.mxu0 0
        %1866 = vmatprep.mubr.bf16.mxu0 0
        %1867 = vmatmul.mubr.bf16.gmra.mrb[0].mxu0 %v408
        %v1868 = vpop.f32.mrb[0].mxu0
        %v1869 = vadd.f32 0.0, %v1868
        %v1870 = vpop.f32.mrb[0].mxu0
        %v1871 = vpop.f32.mrb[0].mxu0
        %v1872 = vadd.f32 0.0, %v1871
        %v1873 = vpop.f32.mrb[0].mxu0
        %1874 = vdwg.mxu0
        %v1875 = vld [vmem:[#allocation13] sm:$0x1]
        %v1876 = vlaneseq
        %v1877 = vshrl.u32 %v1876, 7
        %v1878 = vsub.s32 0, %v1877
        %v1879 = vrot.slane %v1875, %v1878
        %v1880 = vmul.f32 %v1869, %v1879
        %v1881 = vmul.f32 %v1872, %v1879
        %v1882 = vld [vmem:[#allocation13 + $0x1] sm:$0x1]
        %v1883 = vlaneseq
        %v1884 = vshrl.u32 %v1883, 7
        %v1885 = vsub.s32 0, %v1884
        %v1886 = vrot.slane %v1882, %v1885
        %v1887 = vadd.f32 %v1880, %v1886
        %v1888 = vadd.f32 %v1881, %v1886
        %v1889 = vadd.f32 %v1768, %v1887
        %v1890 = vadd.f32 %v1769, %v1888
        %v1891 = vmax.f32 %v1889, 0.0
        %v1892 = vmax.f32 %v1890, 0.0
        %1893 = vst [vmem:[%s326] sm:$0xff] %v1891
        %1894 = vst [vmem:[%s326 + $0x8] sm:$0xff] %v1892
        %s1895 = sand.u32 %s173, 1
        %s1896 = scalar_lea.sflag [#allocation6], %s1895
        %s1897 = sand.u32 %s173, 1
        %s1898 = smul.addr %s1897, 16
        %s1899 = scalar_lea.vmem [#allocation15], %s1898
        // Predicated region
        $region73: #{tpu_custom_call.1} parent=43 // pred_check
          %p1900 = pneg %p183
        $region74: #{tpu_custom_call.1} parent=43 // pred_check_branch
          %1902 = sbr.rel (%p1900) target = $region76
        $region75: #{tpu_custom_call.1} parent=43 // pred_region
          %s1903 = smul.u32 2, %s30
          %s1905 = ssub.s32 256, 256
          %1906 = vsyncadd %s1896, %s1905
          %s1907 = smul.addr %s29, 2
          %s1908 = sadd.s32 %s1903, %s1907
          %s1909 = smul.addr %s1908, 128
          %s1910 = scalar_lea.hbm %s7, %s1909
          %s1911 = sshll.u32 %s1899, 4
          %s1912 = int_to_ptr.vmem [resolvable:$true] %s1911
          %1917 = dma.vmem_to_hbm [thread:$0]  %s1912, 256, %s1910, %s1896, 128, 128, 8
        $region76: #{tpu_custom_call.1} parent=43 // pred_fallthru
          _
      $region44: #{tpu_custom_call.1} parent=5 // pred_fallthru
        _
      %p1918 = scmp.le.s32.totalorder 2, %s20
      // Predicated region
      $region77: #{tpu_custom_call.1} parent=5 // pred_check
        %p1919 = pneg %p1918
      $region78: #{tpu_custom_call.1} parent=5 // pred_check_branch
        %1921 = sbr.rel (%p1919) target = $region80
      $region79: #{tpu_custom_call.1} parent=5 // pred_region
        %s1922 = ssub.s32 %s20, 2
        // Predicated region
        $region81: #{tpu_custom_call.1} parent=79 // pred_check
          %p1923 = pneg %p189
        $region82: #{tpu_custom_call.1} parent=79 // pred_check_branch
          %1925 = sbr.rel (%p1923) target = $region84
        $region83: #{tpu_custom_call.1} parent=79 // pred_region
          %s1926 = sand.u32 %s174, 1
          %s1927 = scalar_lea.sflag [#allocation6], %s1926
          %s1928 = sand.u32 %s174, 1
          %s1929 = smul.addr %s1928, 16
          %s1930 = scalar_lea.vmem [#allocation15], %s1929
          %1931 = dma.done %s1927, 256
        $region84: #{tpu_custom_call.1} parent=79 // pred_fallthru
          _
      $region80: #{tpu_custom_call.1} parent=5 // pred_fallthru
        _
    $region6: #{tpu_custom_call.1} parent=1 // loop_footer
      %s24 = sadd.s32 1, %s20
    $region7: #{tpu_custom_call.1} parent=1 // loop_footer_branch
      %19 = sbr.rel target = $region3
    $region8: #{tpu_custom_call.1} parent=1 // loop_exit
      _
    %1932 = vsyncpa [#allocation5], 1
    %s1933 = scalar_lea.sflag [#allocation5], 1
    %1934 = vsyncpa %s1933, 1
    %1935 = vsyncpa [#allocation8], 1
    %1936 = vsyncpa [#allocation11], 1
    %1937 = vsyncpa [#allocation14], 1
    %1938 = vsyncpa [#allocation6], 1
    %s1939 = scalar_lea.sflag [#allocation6], 1
    %1940 = vsyncpa %s1939, 1
  %1941 = vsyncmov [#allocation3]
  %s1942 = vpop.sfrf %1941
  %p1943 = scmp.eq.s32.totalorder %s1942, 0
  %p1944 = pneg %p1943
  %1946 = shalt.err (%p1944)

</llo_original>
